<compile_context>
chip_gen: v7x
topology: tpu7x:2x2x1
jax: 0.10.0
libtpu: 0.0.40
codegen_flags: <defaults>
</compile_context>

<pallas_src>
import functools
import math

import jax
import jax.numpy as jnp
from jax.experimental import pallas as pl
from jax.experimental.pallas import tpu as pltpu


def _vmem_limit_bytes():
    # Half of physical VMEM (v5e/v6e: 64 MiB, v7x: 32 MiB), capped at 96 MiB.
    # Falls back to a safe 32 MiB if the hardware query is unavailable.
    try:
        cap = pltpu.get_tpu_info().vmem_capacity_bytes
        return int(min(cap // 2, 96 * 1024 * 1024))
    except Exception:
        return 32 * 1024 * 1024


def _ln(y, g, b):
    # LayerNorm over the last dim, eps = 1e-5 (PyTorch default), f32 math.
    mean = jnp.mean(y, axis=-1, keepdims=True)
    var = jnp.mean((y - mean) ** 2, axis=-1, keepdims=True)
    return (y - mean) * jax.lax.rsqrt(var + 1e-5) * g + b


# ------------------------------ fused kernel --------------------------------

def _audio_encoder_kernel(src_ref, in_w_ref, in_b_ref, pe_ref,
                          wqkv_ref, bqkv_ref, wo_ref,
                          w1_ref, b1_ref, w2_ref, vec_ref,
                          o_ref, act_ref, *, nhead, d_model):
    # grid = (batch, layer); one batch element, one encoder layer per step.
    l = pl.program_id(1)

    # ---- layer 0 only: input projection + positional encoding (fused) ------
    @pl.when(l == 0)
    def _():
        y = jnp.dot(src_ref[0], in_w_ref[...], preferred_element_type=jnp.float32)
        act_ref[...] = y + in_b_ref[...] + pe_ref[...]

    x = act_ref[...]                        # (S, D) f32 residual stream
    cdt = wqkv_ref.dtype                    # bf16 compute dtype for the MXU
    xb = x.astype(cdt)

    # ---- self-attention: fused QKV projection -------------------------------
    qkv = jnp.dot(xb, wqkv_ref[0], preferred_element_type=jnp.float32) + bqkv_ref[0]
    qkv = qkv.astype(cdt)                   # bf16 operands for per-head matmuls
    dh = d_model // nhead
    head_outs = []
    for h in range(nhead):
        qh = qkv[:, h * dh:(h + 1) * dh]                           # scale pre-folded
        kh = qkv[:, d_model + h * dh:d_model + (h + 1) * dh]
        vh = qkv[:, 2 * d_model + h * dh:2 * d_model + (h + 1) * dh]
        # contract last dims directly (no explicit transpose); f32 accumulation
        s = jax.lax.dot_general(qh, kh, (((1,), (1,)), ((), ())),
                                preferred_element_type=jnp.float32)
        m = jnp.max(s, axis=-1, keepdims=True)
        p = jnp.exp(s - m)
        p = p * pl.reciprocal(jnp.sum(p, axis=-1, keepdims=True), approx=True)
        head_outs.append(jnp.dot(p.astype(cdt), vh,
                                 preferred_element_type=jnp.float32))
    # lane-dense (S, D) value in registers; no per-head partial stores
    attn = jnp.concatenate(head_outs, axis=-1)

    vecs = vec_ref[0]                       # (6, D) packed f32 per-layer params
    out_b, g1, beta1, b2, g2, beta2 = (vecs[i:i + 1, :] for i in range(6))

    # ---- out-proj + residual + LayerNorm1 (post-norm) -----------------------
    y = jnp.dot(attn.astype(cdt), wo_ref[0], preferred_element_type=jnp.float32)
    x1 = _ln(y + out_b + x, g1, beta1)

    # ---- FFN (lin1 + ReLU + lin2) + residual + LayerNorm2 -------------------
    hmid = jnp.dot(x1.astype(cdt), w1_ref[0],
                   preferred_element_type=jnp.float32) + b1_ref[0]
    hmid = jnp.maximum(hmid, 0.0).astype(cdt)        # (S, dim_ff) never hits HBM
    y2 = jnp.dot(hmid, w2_ref[0], preferred_element_type=jnp.float32) + b2 + x1
    x2 = _ln(y2, g2, beta2)

    act_ref[...] = x2                       # carry residual stream to next layer

    @pl.when(l == pl.num_programs(1) - 1)
    def _():
        o_ref[0] = x2.astype(o_ref.dtype)   # single lane-dense store per batch


# ------------------------------ kernel wrapper -------------------------------

def audio_encoder_forward(params, src, pe, nhead):
    # src: (B, S, input_dim)
    B, S, Din = src.shape
    wqkv = params["wqkv"]
    L, D, _ = wqkv.shape
    F = params["w1"].shape[2]
    dtype = wqkv.dtype

    kern = functools.partial(_audio_encoder_kernel, nhead=nhead, d_model=D)
    return pl.pallas_call(
        kern,
        out_shape=jax.ShapeDtypeStruct((B, S, D), dtype),
        grid=(B, L),
        in_specs=[
            pl.BlockSpec((1, S, Din),   lambda b, l: (b, 0, 0)),   # src (read at l==0)
            pl.BlockSpec((Din, D),      lambda b, l: (0, 0)),      # input proj weight
            pl.BlockSpec((1, D),        lambda b, l: (0, 0)),      # input proj bias
            pl.BlockSpec((S, D),        lambda b, l: (0, 0)),      # positional encoding
            pl.BlockSpec((1, D, 3 * D), lambda b, l: (l, 0, 0)),   # per-layer W_qkv
            pl.BlockSpec((1, 1, 3 * D), lambda b, l: (l, 0, 0)),   # per-layer b_qkv
            pl.BlockSpec((1, D, D),     lambda b, l: (l, 0, 0)),   # per-layer W_out
            pl.BlockSpec((1, D, F),     lambda b, l: (l, 0, 0)),   # per-layer W1
            pl.BlockSpec((1, 1, F),     lambda b, l: (l, 0, 0)),   # per-layer b1
            pl.BlockSpec((1, F, D),     lambda b, l: (l, 0, 0)),   # per-layer W2
            pl.BlockSpec((1, 6, D),     lambda b, l: (l, 0, 0)),   # packed small vecs
        ],
        out_specs=pl.BlockSpec((1, S, D), lambda b, l: (b, 0, 0)),
        scratch_shapes=[pltpu.VMEM((S, D), jnp.float32)],          # residual carry
        compiler_params=pltpu.CompilerParams(
            dimension_semantics=("parallel", "arbitrary"),
            vmem_limit_bytes=_vmem_limit_bytes(),
        ),
    )(src.astype(dtype), params["in_w"], params["in_b"], pe[:S],
      wqkv, params["bqkv"], params["wo"], params["w1"], params["b1"],
      params["w2"], params["vecs"])


# ----------------------------- params / PE setup -----------------------------

def make_positional_encoding(max_len, d_model):
    position = jnp.arange(max_len, dtype=jnp.float32)[:, None]
    div_term = jnp.exp(jnp.arange(0, d_model, 2, dtype=jnp.float32)
                       * (-math.log(10000.0) / d_model))
    pe = jnp.zeros((max_len, d_model), dtype=jnp.float32)
    pe = pe.at[:, 0::2].set(jnp.sin(position * div_term))
    pe = pe.at[:, 1::2].set(jnp.cos(position * div_term))
    return pe


def init_params(key, input_dim, d_model, nhead, num_layers, dim_ff,
                dtype=jnp.bfloat16):
    # Weights stored transposed (kernel computes x @ W_t + b) in bf16, stacked
    # over layers; biases/LN params in f32.  The column split of the transposed
    # (D, 3D) QKV weight preserves PyTorch's row-chunked in_proj ordering
    # (q, then k, then v); the 1/sqrt(head_dim) attention scale is folded into
    # the q columns / bias at init.
    assert d_model % nhead == 0
    scale = 1.0 / math.sqrt(d_model // nhead)

    def nrm(k, shape, s=0.05):
        return s * jax.random.normal(k, shape, dtype=jnp.float32)

    ks = jax.random.split(key, 10)
    wqkv = nrm(ks[2], (num_layers, d_model, 3 * d_model))
    bqkv = nrm(ks[3], (num_layers, 1, 3 * d_model))
    wqkv = wqkv.at[:, :, :d_model].multiply(scale)
    bqkv = bqkv.at[:, :, :d_model].multiply(scale)

    out_b = nrm(ks[5], (num_layers, 1, d_model))
    ln1_g = jnp.ones((num_layers, 1, d_model), jnp.float32)
    ln1_b = jnp.zeros((num_layers, 1, d_model), jnp.float32)
    b2 = nrm(ks[8], (num_layers, 1, d_model))
    ln2_g = jnp.ones((num_layers, 1, d_model), jnp.float32)
    ln2_b = jnp.zeros((num_layers, 1, d_model), jnp.float32)
    # packed per-layer vectors: [out_b, ln1_g, ln1_b, lin2_b, ln2_g, ln2_b]
    vecs = jnp.concatenate([out_b, ln1_g, ln1_b, b2, ln2_g, ln2_b], axis=1)

    return {
        "in_w": nrm(ks[0], (input_dim, d_model)).astype(dtype),
        "in_b": nrm(ks[1], (1, d_model)),
        "wqkv": wqkv.astype(dtype),
        "bqkv": bqkv,
        "wo": nrm(ks[4], (num_layers, d_model, d_model)).astype(dtype),
        "w1": nrm(ks[6], (num_layers, d_model, dim_ff)).astype(dtype),
        "b1": nrm(ks[7], (num_layers, 1, dim_ff)),
        "w2": nrm(ks[9], (num_layers, dim_ff, d_model)).astype(dtype),
        "vecs": vecs,
    }


# ----------------------------------- main ------------------------------------

if __name__ == "__main__":
    # small shapes consistent with the module's forward
    B, S = 2, 8
    INPUT_DIM, D_MODEL, NHEAD, NUM_LAYERS, DIM_FF = 16, 32, 4, 2, 64

    key = jax.random.PRNGKey(0)
    k_params, k_src = jax.random.split(key)

    params = init_params(k_params, INPUT_DIM, D_MODEL, NHEAD, NUM_LAYERS, DIM_FF)
    pe = make_positional_encoding(max_len=64, d_model=D_MODEL)
    src = jax.random.normal(k_src, (B, S, INPUT_DIM), dtype=jnp.float32)

    fwd = jax.jit(functools.partial(audio_encoder_forward, nhead=NHEAD))
    out = jax.block_until_ready(fwd(params, src, pe))

    assert out.shape == (B, S, D_MODEL), out.shape
    assert jnp.all(jnp.isfinite(out.astype(jnp.float32)))
    print("KERNEL_OK")
</pallas_src>

<mosaic_0001>
module attributes {stable_mosaic.version = 11 : i64} {
  func.func @_audio_encoder_kernel(%arg0: i32, %arg1: i32, %arg2: memref<1x8x16xbf16, #tpu.memory_space<vmem>>, %arg3: memref<16x32xbf16, #tpu.memory_space<vmem>>, %arg4: memref<1x32xf32, #tpu.memory_space<vmem>>, %arg5: memref<8x32xf32, #tpu.memory_space<vmem>>, %arg6: memref<1x32x96xbf16, #tpu.memory_space<vmem>>, %arg7: memref<1x1x96xf32, #tpu.memory_space<vmem>>, %arg8: memref<1x32x32xbf16, #tpu.memory_space<vmem>>, %arg9: memref<1x32x64xbf16, #tpu.memory_space<vmem>>, %arg10: memref<1x1x64xf32, #tpu.memory_space<vmem>>, %arg11: memref<1x64x32xbf16, #tpu.memory_space<vmem>>, %arg12: memref<1x6x32xf32, #tpu.memory_space<vmem>>, %arg13: memref<1x8x32xbf16, #tpu.memory_space<vmem>>, %arg14: memref<8x32xf32, #tpu.memory_space<vmem>>) attributes {dimension_semantics = [#tpu.dimension_semantics<parallel>, #tpu.dimension_semantics<arbitrary>], iteration_bounds = array<i64: 2, 2>, scalar_prefetch = 0 : i64, scratch_operands = 1 : i64, tpu.core_type = #tpu.core_type<tc>, window_params = [{transform_indices = @transform_0, window_bounds = array<i64: 1, 8, 16>}, {pipeline_mode = #tpu.pipeline_mode<synchronous>, transform_indices = @transform_1, window_bounds = array<i64: 16, 32>}, {pipeline_mode = #tpu.pipeline_mode<synchronous>, transform_indices = @transform_2, window_bounds = array<i64: 1, 32>}, {pipeline_mode = #tpu.pipeline_mode<synchronous>, transform_indices = @transform_3, window_bounds = array<i64: 8, 32>}, {transform_indices = @transform_4, window_bounds = array<i64: 1, 32, 96>}, {transform_indices = @transform_5, window_bounds = array<i64: 1, 1, 96>}, {transform_indices = @transform_6, window_bounds = array<i64: 1, 32, 32>}, {transform_indices = @transform_7, window_bounds = array<i64: 1, 32, 64>}, {transform_indices = @transform_8, window_bounds = array<i64: 1, 1, 64>}, {transform_indices = @transform_9, window_bounds = array<i64: 1, 64, 32>}, {transform_indices = @transform_10, window_bounds = array<i64: 1, 6, 32>}, {transform_indices = @transform_11, window_bounds = array<i64: 1, 8, 32>}]} {
    %c0_i32 = arith.constant 0 : i32
    %0 = arith.cmpi eq, %arg1, %c0_i32 : i32
    %1 = arith.extui %0 : i1 to i32
    %c0_i32_0 = arith.constant 0 : i32
    %2 = arith.cmpi ne, %1, %c0_i32_0 : i32
    scf.if %2 {
      %c0_56 = arith.constant 0 : index
      %c0_57 = arith.constant 0 : index
      %c0_58 = arith.constant 0 : index
      %158 = vector.load %arg2[%c0_56, %c0_57, %c0_58] : memref<1x8x16xbf16, #tpu.memory_space<vmem>>, vector<1x8x16xbf16>
      %159 = vector.shape_cast %158 : vector<1x8x16xbf16> to vector<8x16xbf16>
      %c0_59 = arith.constant 0 : index
      %c0_60 = arith.constant 0 : index
      %160 = vector.load %arg3[%c0_59, %c0_60] : memref<16x32xbf16, #tpu.memory_space<vmem>>, vector<16x32xbf16>
      %cst_61 = arith.constant dense<0.000000e+00> : vector<8x32xf32>
      %161 = tpu.matmul %159, %160, %cst_61 {dimension_numbers = #tpu.dot_dimension_numbers<[1], [0], [0], [1], [0, 0, 1, 1], [], []>} : vector<8x16xbf16>, vector<16x32xbf16>, vector<8x32xf32> -> vector<8x32xf32>
      %c0_62 = arith.constant 0 : index
      %c0_63 = arith.constant 0 : index
      %162 = vector.load %arg4[%c0_62, %c0_63] : memref<1x32xf32, #tpu.memory_space<vmem>>, vector<1x32xf32>
      %163 = vector.broadcast %162 : vector<1x32xf32> to vector<8x32xf32>
      %164 = arith.addf %161, %163 : vector<8x32xf32>
      %c0_64 = arith.constant 0 : index
      %c0_65 = arith.constant 0 : index
      %165 = vector.load %arg5[%c0_64, %c0_65] : memref<8x32xf32, #tpu.memory_space<vmem>>, vector<8x32xf32>
      %166 = arith.addf %164, %165 : vector<8x32xf32>
      %c0_66 = arith.constant 0 : index
      %c0_67 = arith.constant 0 : index
      %167 = vector.load %arg14[%c0_66, %c0_67] : memref<8x32xf32, #tpu.memory_space<vmem>>, vector<8x32xf32>
      tpu.vector_store %arg14[%c0_66, %c0_67], %166 {strides = array<i32>} : memref<8x32xf32, #tpu.memory_space<vmem>>, vector<8x32xf32>,
    } else {
    }
    %c0 = arith.constant 0 : index
    %c0_1 = arith.constant 0 : index
    %3 = vector.load %arg14[%c0, %c0_1] : memref<8x32xf32, #tpu.memory_space<vmem>>, vector<8x32xf32>
    %4 = arith.truncf %3 : vector<8x32xf32> to vector<8x32xbf16>
    %c0_2 = arith.constant 0 : index
    %c0_3 = arith.constant 0 : index
    %c0_4 = arith.constant 0 : index
    %5 = vector.load %arg6[%c0_2, %c0_3, %c0_4] : memref<1x32x96xbf16, #tpu.memory_space<vmem>>, vector<1x32x96xbf16>
    %6 = vector.shape_cast %5 : vector<1x32x96xbf16> to vector<32x96xbf16>
    %cst = arith.constant dense<0.000000e+00> : vector<8x96xf32>
    %7 = tpu.matmul %4, %6, %cst {dimension_numbers = #tpu.dot_dimension_numbers<[1], [0], [0], [1], [0, 0, 1, 1], [], []>} : vector<8x32xbf16>, vector<32x96xbf16>, vector<8x96xf32> -> vector<8x96xf32>
    %c0_5 = arith.constant 0 : index
    %c0_6 = arith.constant 0 : index
    %c0_7 = arith.constant 0 : index
    %8 = vector.load %arg7[%c0_5, %c0_6, %c0_7] : memref<1x1x96xf32, #tpu.memory_space<vmem>>, vector<1x1x96xf32>
    %9 = vector.shape_cast %8 : vector<1x1x96xf32> to vector<1x96xf32>
    %10 = vector.broadcast %9 : vector<1x96xf32> to vector<8x96xf32>
    %11 = arith.addf %7, %10 : vector<8x96xf32>
    %12 = arith.truncf %11 : vector<8x96xf32> to vector<8x96xbf16>
    %13 = vector.extract_strided_slice %12 {offsets = [0, 0], sizes = [8, 8], strides = [1, 1]} : vector<8x96xbf16> to vector<8x8xbf16>
    %14 = vector.extract_strided_slice %12 {offsets = [0, 32], sizes = [8, 8], strides = [1, 1]} : vector<8x96xbf16> to vector<8x8xbf16>
    %15 = vector.extract_strided_slice %12 {offsets = [0, 64], sizes = [8, 8], strides = [1, 1]} : vector<8x96xbf16> to vector<8x8xbf16>
    %cst_8 = arith.constant dense<0.000000e+00> : vector<8x8xf32>
    %16 = tpu.matmul %13, %14, %cst_8 {dimension_numbers = #tpu.dot_dimension_numbers<[1], [1], [0], [0], [0, 0, 1, 0], [], []>} : vector<8x8xbf16>, vector<8x8xbf16>, vector<8x8xf32> -> vector<8x8xf32>
    %cst_9 = arith.constant dense<0xFF800000> : vector<8xf32>
    %17 = vector.multi_reduction <maximumf>, %16, %cst_9 [1] : vector<8x8xf32> to vector<8xf32>
    %18 = vector.shape_cast %17 : vector<8xf32> to vector<8x1xf32>
    %19 = vector.broadcast %18 : vector<8x1xf32> to vector<8x8xf32>
    %20 = arith.subf %16, %19 : vector<8x8xf32>
    %21 = math.exp %20 : vector<8x8xf32>
    %cst_10 = arith.constant dense<0.000000e+00> : vector<8xf32>
    %22 = vector.multi_reduction <add>, %21, %cst_10 [1] : vector<8x8xf32> to vector<8xf32>
    %23 = vector.shape_cast %22 : vector<8xf32> to vector<8x1xf32>
    %24 = tpu.reciprocal %23 {approx = true} : vector<8x1xf32> -> vector<8x1xf32>
    %25 = vector.broadcast %24 : vector<8x1xf32> to vector<8x8xf32>
    %26 = arith.mulf %21, %25 : vector<8x8xf32>
    %27 = arith.truncf %26 : vector<8x8xf32> to vector<8x8xbf16>
    %cst_11 = arith.constant dense<0.000000e+00> : vector<8x8xf32>
    %28 = tpu.matmul %27, %15, %cst_11 {dimension_numbers = #tpu.dot_dimension_numbers<[1], [0], [0], [1], [0, 0, 1, 1], [], []>} : vector<8x8xbf16>, vector<8x8xbf16>, vector<8x8xf32> -> vector<8x8xf32>
    %29 = vector.extract_strided_slice %12 {offsets = [0, 8], sizes = [8, 8], strides = [1, 1]} : vector<8x96xbf16> to vector<8x8xbf16>
    %30 = vector.extract_strided_slice %12 {offsets = [0, 40], sizes = [8, 8], strides = [1, 1]} : vector<8x96xbf16> to vector<8x8xbf16>
    %31 = vector.extract_strided_slice %12 {offsets = [0, 72], sizes = [8, 8], strides = [1, 1]} : vector<8x96xbf16> to vector<8x8xbf16>
    %cst_12 = arith.constant dense<0.000000e+00> : vector<8x8xf32>
    %32 = tpu.matmul %29, %30, %cst_12 {dimension_numbers = #tpu.dot_dimension_numbers<[1], [1], [0], [0], [0, 0, 1, 0], [], []>} : vector<8x8xbf16>, vector<8x8xbf16>, vector<8x8xf32> -> vector<8x8xf32>
    %cst_13 = arith.constant dense<0xFF800000> : vector<8xf32>
    %33 = vector.multi_reduction <maximumf>, %32, %cst_13 [1] : vector<8x8xf32> to vector<8xf32>
    %34 = vector.shape_cast %33 : vector<8xf32> to vector<8x1xf32>
    %35 = vector.broadcast %34 : vector<8x1xf32> to vector<8x8xf32>
    %36 = arith.subf %32, %35 : vector<8x8xf32>
    %37 = math.exp %36 : vector<8x8xf32>
    %cst_14 = arith.constant dense<0.000000e+00> : vector<8xf32>
    %38 = vector.multi_reduction <add>, %37, %cst_14 [1] : vector<8x8xf32> to vector<8xf32>
    %39 = vector.shape_cast %38 : vector<8xf32> to vector<8x1xf32>
    %40 = tpu.reciprocal %39 {approx = true} : vector<8x1xf32> -> vector<8x1xf32>
    %41 = vector.broadcast %40 : vector<8x1xf32> to vector<8x8xf32>
    %42 = arith.mulf %37, %41 : vector<8x8xf32>
    %43 = arith.truncf %42 : vector<8x8xf32> to vector<8x8xbf16>
    %cst_15 = arith.constant dense<0.000000e+00> : vector<8x8xf32>
    %44 = tpu.matmul %43, %31, %cst_15 {dimension_numbers = #tpu.dot_dimension_numbers<[1], [0], [0], [1], [0, 0, 1, 1], [], []>} : vector<8x8xbf16>, vector<8x8xbf16>, vector<8x8xf32> -> vector<8x8xf32>
    %45 = vector.extract_strided_slice %12 {offsets = [0, 16], sizes = [8, 8], strides = [1, 1]} : vector<8x96xbf16> to vector<8x8xbf16>
    %46 = vector.extract_strided_slice %12 {offsets = [0, 48], sizes = [8, 8], strides = [1, 1]} : vector<8x96xbf16> to vector<8x8xbf16>
    %47 = vector.extract_strided_slice %12 {offsets = [0, 80], sizes = [8, 8], strides = [1, 1]} : vector<8x96xbf16> to vector<8x8xbf16>
    %cst_16 = arith.constant dense<0.000000e+00> : vector<8x8xf32>
    %48 = tpu.matmul %45, %46, %cst_16 {dimension_numbers = #tpu.dot_dimension_numbers<[1], [1], [0], [0], [0, 0, 1, 0], [], []>} : vector<8x8xbf16>, vector<8x8xbf16>, vector<8x8xf32> -> vector<8x8xf32>
    %cst_17 = arith.constant dense<0xFF800000> : vector<8xf32>
    %49 = vector.multi_reduction <maximumf>, %48, %cst_17 [1] : vector<8x8xf32> to vector<8xf32>
    %50 = vector.shape_cast %49 : vector<8xf32> to vector<8x1xf32>
    %51 = vector.broadcast %50 : vector<8x1xf32> to vector<8x8xf32>
    %52 = arith.subf %48, %51 : vector<8x8xf32>
    %53 = math.exp %52 : vector<8x8xf32>
    %cst_18 = arith.constant dense<0.000000e+00> : vector<8xf32>
    %54 = vector.multi_reduction <add>, %53, %cst_18 [1] : vector<8x8xf32> to vector<8xf32>
    %55 = vector.shape_cast %54 : vector<8xf32> to vector<8x1xf32>
    %56 = tpu.reciprocal %55 {approx = true} : vector<8x1xf32> -> vector<8x1xf32>
    %57 = vector.broadcast %56 : vector<8x1xf32> to vector<8x8xf32>
    %58 = arith.mulf %53, %57 : vector<8x8xf32>
    %59 = arith.truncf %58 : vector<8x8xf32> to vector<8x8xbf16>
    %cst_19 = arith.constant dense<0.000000e+00> : vector<8x8xf32>
    %60 = tpu.matmul %59, %47, %cst_19 {dimension_numbers = #tpu.dot_dimension_numbers<[1], [0], [0], [1], [0, 0, 1, 1], [], []>} : vector<8x8xbf16>, vector<8x8xbf16>, vector<8x8xf32> -> vector<8x8xf32>
    %61 = vector.extract_strided_slice %12 {offsets = [0, 24], sizes = [8, 8], strides = [1, 1]} : vector<8x96xbf16> to vector<8x8xbf16>
    %62 = vector.extract_strided_slice %12 {offsets = [0, 56], sizes = [8, 8], strides = [1, 1]} : vector<8x96xbf16> to vector<8x8xbf16>
    %63 = vector.extract_strided_slice %12 {offsets = [0, 88], sizes = [8, 8], strides = [1, 1]} : vector<8x96xbf16> to vector<8x8xbf16>
    %cst_20 = arith.constant dense<0.000000e+00> : vector<8x8xf32>
    %64 = tpu.matmul %61, %62, %cst_20 {dimension_numbers = #tpu.dot_dimension_numbers<[1], [1], [0], [0], [0, 0, 1, 0], [], []>} : vector<8x8xbf16>, vector<8x8xbf16>, vector<8x8xf32> -> vector<8x8xf32>
    %cst_21 = arith.constant dense<0xFF800000> : vector<8xf32>
    %65 = vector.multi_reduction <maximumf>, %64, %cst_21 [1] : vector<8x8xf32> to vector<8xf32>
    %66 = vector.shape_cast %65 : vector<8xf32> to vector<8x1xf32>
    %67 = vector.broadcast %66 : vector<8x1xf32> to vector<8x8xf32>
    %68 = arith.subf %64, %67 : vector<8x8xf32>
    %69 = math.exp %68 : vector<8x8xf32>
    %cst_22 = arith.constant dense<0.000000e+00> : vector<8xf32>
    %70 = vector.multi_reduction <add>, %69, %cst_22 [1] : vector<8x8xf32> to vector<8xf32>
    %71 = vector.shape_cast %70 : vector<8xf32> to vector<8x1xf32>
    %72 = tpu.reciprocal %71 {approx = true} : vector<8x1xf32> -> vector<8x1xf32>
    %73 = vector.broadcast %72 : vector<8x1xf32> to vector<8x8xf32>
    %74 = arith.mulf %69, %73 : vector<8x8xf32>
    %75 = arith.truncf %74 : vector<8x8xf32> to vector<8x8xbf16>
    %cst_23 = arith.constant dense<0.000000e+00> : vector<8x8xf32>
    %76 = tpu.matmul %75, %63, %cst_23 {dimension_numbers = #tpu.dot_dimension_numbers<[1], [0], [0], [1], [0, 0, 1, 1], [], []>} : vector<8x8xbf16>, vector<8x8xbf16>, vector<8x8xf32> -> vector<8x8xf32>
    %77 = tpu.concatenate %28, %44, %60, %76 in 1 : vector<8x8xf32>, vector<8x8xf32>, vector<8x8xf32>, vector<8x8xf32> -> vector<8x32xf32>
    %c0_24 = arith.constant 0 : index
    %c0_25 = arith.constant 0 : index
    %c0_26 = arith.constant 0 : index
    %78 = vector.load %arg12[%c0_24, %c0_25, %c0_26] : memref<1x6x32xf32, #tpu.memory_space<vmem>>, vector<1x6x32xf32>
    %79 = vector.shape_cast %78 : vector<1x6x32xf32> to vector<6x32xf32>
    %80 = vector.extract_strided_slice %79 {offsets = [0, 0], sizes = [1, 32], strides = [1, 1]} : vector<6x32xf32> to vector<1x32xf32>
    %81 = vector.extract_strided_slice %79 {offsets = [1, 0], sizes = [1, 32], strides = [1, 1]} : vector<6x32xf32> to vector<1x32xf32>
    %82 = vector.extract_strided_slice %79 {offsets = [2, 0], sizes = [1, 32], strides = [1, 1]} : vector<6x32xf32> to vector<1x32xf32>
    %83 = vector.extract_strided_slice %79 {offsets = [3, 0], sizes = [1, 32], strides = [1, 1]} : vector<6x32xf32> to vector<1x32xf32>
    %84 = vector.extract_strided_slice %79 {offsets = [4, 0], sizes = [1, 32], strides = [1, 1]} : vector<6x32xf32> to vector<1x32xf32>
    %85 = vector.extract_strided_slice %79 {offsets = [5, 0], sizes = [1, 32], strides = [1, 1]} : vector<6x32xf32> to vector<1x32xf32>
    %86 = arith.truncf %77 : vector<8x32xf32> to vector<8x32xbf16>
    %c0_27 = arith.constant 0 : index
    %c0_28 = arith.constant 0 : index
    %c0_29 = arith.constant 0 : index
    %87 = vector.load %arg8[%c0_27, %c0_28, %c0_29] : memref<1x32x32xbf16, #tpu.memory_space<vmem>>, vector<1x32x32xbf16>
    %88 = vector.shape_cast %87 : vector<1x32x32xbf16> to vector<32x32xbf16>
    %cst_30 = arith.constant dense<0.000000e+00> : vector<8x32xf32>
    %89 = tpu.matmul %86, %88, %cst_30 {dimension_numbers = #tpu.dot_dimension_numbers<[1], [0], [0], [1], [0, 0, 1, 1], [], []>} : vector<8x32xbf16>, vector<32x32xbf16>, vector<8x32xf32> -> vector<8x32xf32>
    %90 = vector.broadcast %80 : vector<1x32xf32> to vector<8x32xf32>
    %91 = arith.addf %89, %90 : vector<8x32xf32>
    %92 = arith.addf %91, %3 : vector<8x32xf32>
    %cst_31 = arith.constant dense<0.000000e+00> : vector<8xf32>
    %93 = vector.multi_reduction <add>, %92, %cst_31 [1] : vector<8x32xf32> to vector<8xf32>
    %94 = vector.shape_cast %93 : vector<8xf32> to vector<8x1xf32>
    %cst_32 = arith.constant 3.200000e+01 : f32
    %95 = vector.broadcast %cst_32 : f32 to vector<8x1xf32>
    %96 = arith.divf %94, %95 : vector<8x1xf32>
    %97 = vector.broadcast %96 : vector<8x1xf32> to vector<8x32xf32>
    %98 = arith.subf %92, %97 : vector<8x32xf32>
    %99 = arith.mulf %98, %98 : vector<8x32xf32>
    %cst_33 = arith.constant dense<0.000000e+00> : vector<8xf32>
    %100 = vector.multi_reduction <add>, %99, %cst_33 [1] : vector<8x32xf32> to vector<8xf32>
    %101 = vector.shape_cast %100 : vector<8xf32> to vector<8x1xf32>
    %cst_34 = arith.constant 3.200000e+01 : f32
    %102 = vector.broadcast %cst_34 : f32 to vector<8x1xf32>
    %103 = arith.divf %101, %102 : vector<8x1xf32>
    %104 = vector.broadcast %96 : vector<8x1xf32> to vector<8x32xf32>
    %105 = arith.subf %92, %104 : vector<8x32xf32>
    %cst_35 = arith.constant 9.99999974E-6 : f32
    %106 = vector.broadcast %cst_35 : f32 to vector<8x1xf32>
    %107 = arith.addf %103, %106 : vector<8x1xf32>
    %108 = math.rsqrt %107 : vector<8x1xf32>
    %109 = vector.broadcast %108 : vector<8x1xf32> to vector<8x32xf32>
    %110 = arith.mulf %105, %109 : vector<8x32xf32>
    %111 = vector.broadcast %81 : vector<1x32xf32> to vector<8x32xf32>
    %112 = arith.mulf %110, %111 : vector<8x32xf32>
    %113 = vector.broadcast %82 : vector<1x32xf32> to vector<8x32xf32>
    %114 = arith.addf %112, %113 : vector<8x32xf32>
    %115 = arith.truncf %114 : vector<8x32xf32> to vector<8x32xbf16>
    %c0_36 = arith.constant 0 : index
    %c0_37 = arith.constant 0 : index
    %c0_38 = arith.constant 0 : index
    %116 = vector.load %arg9[%c0_36, %c0_37, %c0_38] : memref<1x32x64xbf16, #tpu.memory_space<vmem>>, vector<1x32x64xbf16>
    %117 = vector.shape_cast %116 : vector<1x32x64xbf16> to vector<32x64xbf16>
    %cst_39 = arith.constant dense<0.000000e+00> : vector<8x64xf32>
    %118 = tpu.matmul %115, %117, %cst_39 {dimension_numbers = #tpu.dot_dimension_numbers<[1], [0], [0], [1], [0, 0, 1, 1], [], []>} : vector<8x32xbf16>, vector<32x64xbf16>, vector<8x64xf32> -> vector<8x64xf32>
    %c0_40 = arith.constant 0 : index
    %c0_41 = arith.constant 0 : index
    %c0_42 = arith.constant 0 : index
    %119 = vector.load %arg10[%c0_40, %c0_41, %c0_42] : memref<1x1x64xf32, #tpu.memory_space<vmem>>, vector<1x1x64xf32>
    %120 = vector.shape_cast %119 : vector<1x1x64xf32> to vector<1x64xf32>
    %121 = vector.broadcast %120 : vector<1x64xf32> to vector<8x64xf32>
    %122 = arith.addf %118, %121 : vector<8x64xf32>
    %cst_43 = arith.constant 0.000000e+00 : f32
    %123 = vector.broadcast %cst_43 : f32 to vector<8x64xf32>
    %124 = arith.maximumf %122, %123 : vector<8x64xf32>
    %125 = arith.truncf %124 : vector<8x64xf32> to vector<8x64xbf16>
    %c0_44 = arith.constant 0 : index
    %c0_45 = arith.constant 0 : index
    %c0_46 = arith.constant 0 : index
    %126 = vector.load %arg11[%c0_44, %c0_45, %c0_46] : memref<1x64x32xbf16, #tpu.memory_space<vmem>>, vector<1x64x32xbf16>
    %127 = vector.shape_cast %126 : vector<1x64x32xbf16> to vector<64x32xbf16>
    %cst_47 = arith.constant dense<0.000000e+00> : vector<8x32xf32>
    %128 = tpu.matmul %125, %127, %cst_47 {dimension_numbers = #tpu.dot_dimension_numbers<[1], [0], [0], [1], [0, 0, 1, 1], [], []>} : vector<8x64xbf16>, vector<64x32xbf16>, vector<8x32xf32> -> vector<8x32xf32>
    %129 = vector.broadcast %83 : vector<1x32xf32> to vector<8x32xf32>
    %130 = arith.addf %128, %129 : vector<8x32xf32>
    %131 = arith.addf %130, %114 : vector<8x32xf32>
    %cst_48 = arith.constant dense<0.000000e+00> : vector<8xf32>
    %132 = vector.multi_reduction <add>, %131, %cst_48 [1] : vector<8x32xf32> to vector<8xf32>
    %133 = vector.shape_cast %132 : vector<8xf32> to vector<8x1xf32>
    %cst_49 = arith.constant 3.200000e+01 : f32
    %134 = vector.broadcast %cst_49 : f32 to vector<8x1xf32>
    %135 = arith.divf %133, %134 : vector<8x1xf32>
    %136 = vector.broadcast %135 : vector<8x1xf32> to vector<8x32xf32>
    %137 = arith.subf %131, %136 : vector<8x32xf32>
    %138 = arith.mulf %137, %137 : vector<8x32xf32>
    %cst_50 = arith.constant dense<0.000000e+00> : vector<8xf32>
    %139 = vector.multi_reduction <add>, %138, %cst_50 [1] : vector<8x32xf32> to vector<8xf32>
    %140 = vector.shape_cast %139 : vector<8xf32> to vector<8x1xf32>
    %cst_51 = arith.constant 3.200000e+01 : f32
    %141 = vector.broadcast %cst_51 : f32 to vector<8x1xf32>
    %142 = arith.divf %140, %141 : vector<8x1xf32>
    %143 = vector.broadcast %135 : vector<8x1xf32> to vector<8x32xf32>
    %144 = arith.subf %131, %143 : vector<8x32xf32>
    %cst_52 = arith.constant 9.99999974E-6 : f32
    %145 = vector.broadcast %cst_52 : f32 to vector<8x1xf32>
    %146 = arith.addf %142, %145 : vector<8x1xf32>
    %147 = math.rsqrt %146 : vector<8x1xf32>
    %148 = vector.broadcast %147 : vector<8x1xf32> to vector<8x32xf32>
    %149 = arith.mulf %144, %148 : vector<8x32xf32>
    %150 = vector.broadcast %84 : vector<1x32xf32> to vector<8x32xf32>
    %151 = arith.mulf %149, %150 : vector<8x32xf32>
    %152 = vector.broadcast %85 : vector<1x32xf32> to vector<8x32xf32>
    %153 = arith.addf %151, %152 : vector<8x32xf32>
    %c0_53 = arith.constant 0 : index
    %c0_54 = arith.constant 0 : index
    %154 = vector.load %arg14[%c0_53, %c0_54] : memref<8x32xf32, #tpu.memory_space<vmem>>, vector<8x32xf32>
    tpu.vector_store %arg14[%c0_53, %c0_54], %153 {strides = array<i32>} : memref<8x32xf32, #tpu.memory_space<vmem>>, vector<8x32xf32>,
    %c1_i32 = arith.constant 1 : i32
    %155 = arith.cmpi eq, %arg1, %c1_i32 : i32
    %156 = arith.extui %155 : i1 to i32
    %c0_i32_55 = arith.constant 0 : i32
    %157 = arith.cmpi ne, %156, %c0_i32_55 : i32
    scf.if %157 {
      %158 = arith.truncf %153 : vector<8x32xf32> to vector<8x32xbf16>
      %c0_56 = arith.constant 0 : index
      %c0_57 = arith.constant 0 : index
      %c0_58 = arith.constant 0 : index
      %159 = vector.load %arg13[%c0_56, %c0_57, %c0_58] : memref<1x8x32xbf16, #tpu.memory_space<vmem>>, vector<1x8x32xbf16>
      %160 = vector.shape_cast %159 : vector<1x8x32xbf16> to vector<8x32xbf16>
      %161 = vector.shape_cast %158 : vector<8x32xbf16> to vector<1x8x32xbf16>
      tpu.vector_store %arg13[%c0_56, %c0_57, %c0_58], %161 {strides = array<i32>} : memref<1x8x32xbf16, #tpu.memory_space<vmem>>, vector<1x8x32xbf16>,
    } else {
    }
    return
  }
  func.func @transform_0(%arg0: i32, %arg1: i32) -> (i32, i32, i32) {
    %c0_i32 = arith.constant 0 : i32
    %c0_i32_0 = arith.constant 0 : i32
    %c0_i32_1 = arith.constant 0 : i32
    return %arg0, %c0_i32, %c0_i32_0 : i32, i32, i32
  }
  func.func @transform_1(%arg0: i32, %arg1: i32) -> (i32, i32) {
    %c0_i32 = arith.constant 0 : i32
    %c0_i32_0 = arith.constant 0 : i32
    %c0_i32_1 = arith.constant 0 : i32
    return %c0_i32, %c0_i32_0 : i32, i32
  }
  func.func @transform_2(%arg0: i32, %arg1: i32) -> (i32, i32) {
    %c0_i32 = arith.constant 0 : i32
    %c0_i32_0 = arith.constant 0 : i32
    %c0_i32_1 = arith.constant 0 : i32
    return %c0_i32, %c0_i32_0 : i32, i32
  }
  func.func @transform_3(%arg0: i32, %arg1: i32) -> (i32, i32) {
    %c0_i32 = arith.constant 0 : i32
    %c0_i32_0 = arith.constant 0 : i32
    %c0_i32_1 = arith.constant 0 : i32
    return %c0_i32, %c0_i32_0 : i32, i32
  }
  func.func @transform_4(%arg0: i32, %arg1: i32) -> (i32, i32, i32) {
    %c0_i32 = arith.constant 0 : i32
    %c0_i32_0 = arith.constant 0 : i32
    %c0_i32_1 = arith.constant 0 : i32
    return %arg1, %c0_i32, %c0_i32_0 : i32, i32, i32
  }
  func.func @transform_5(%arg0: i32, %arg1: i32) -> (i32, i32, i32) {
    %c0_i32 = arith.constant 0 : i32
    %c0_i32_0 = arith.constant 0 : i32
    %c0_i32_1 = arith.constant 0 : i32
    return %arg1, %c0_i32, %c0_i32_0 : i32, i32, i32
  }
  func.func @transform_6(%arg0: i32, %arg1: i32) -> (i32, i32, i32) {
    %c0_i32 = arith.constant 0 : i32
    %c0_i32_0 = arith.constant 0 : i32
    %c0_i32_1 = arith.constant 0 : i32
    return %arg1, %c0_i32, %c0_i32_0 : i32, i32, i32
  }
  func.func @transform_7(%arg0: i32, %arg1: i32) -> (i32, i32, i32) {
    %c0_i32 = arith.constant 0 : i32
    %c0_i32_0 = arith.constant 0 : i32
    %c0_i32_1 = arith.constant 0 : i32
    return %arg1, %c0_i32, %c0_i32_0 : i32, i32, i32
  }
  func.func @transform_8(%arg0: i32, %arg1: i32) -> (i32, i32, i32) {
    %c0_i32 = arith.constant 0 : i32
    %c0_i32_0 = arith.constant 0 : i32
    %c0_i32_1 = arith.constant 0 : i32
    return %arg1, %c0_i32, %c0_i32_0 : i32, i32, i32
  }
  func.func @transform_9(%arg0: i32, %arg1: i32) -> (i32, i32, i32) {
    %c0_i32 = arith.constant 0 : i32
    %c0_i32_0 = arith.constant 0 : i32
    %c0_i32_1 = arith.constant 0 : i32
    return %arg1, %c0_i32, %c0_i32_0 : i32, i32, i32
  }
  func.func @transform_10(%arg0: i32, %arg1: i32) -> (i32, i32, i32) {
    %c0_i32 = arith.constant 0 : i32
    %c0_i32_0 = arith.constant 0 : i32
    %c0_i32_1 = arith.constant 0 : i32
    return %arg1, %c0_i32, %c0_i32_0 : i32, i32, i32
  }
  func.func @transform_11(%arg0: i32, %arg1: i32) -> (i32, i32, i32) {
    %c0_i32 = arith.constant 0 : i32
    %c0_i32_0 = arith.constant 0 : i32
    %c0_i32_1 = arith.constant 0 : i32
    return %arg0, %c0_i32, %c0_i32_0 : i32, i32, i32
  }
}

</mosaic_0001>

<llo_original>
// kernel: audio_encoder_forward.1
$region0: #{audio_encoder_forward.1}
  #allocation0 [shape = 'u32[]', space=smem, size = 0x4, offset = 0x4, fixed_abs, tag = 'smem constant byte address 0x4 - core index']
  #allocation1 [shape = 'u32[144,128]{1,0:T(1,128)}', space=vmem, size = 0x12000, scoped, tag = 'internal scratch']
  #allocation2 [shape = 'f32[8,32]{1,0:T(8,128)}', space=vmem, size = 0x1000, scoped, tag = 'scratch operand']
  %s0 = inlined_call_operand.vmem [shape: bf16[2,8,16], index: 0, kind: input, shape index: {}]
  %s1 = inlined_call_operand.vmem [shape: bf16[16,32], index: 1, kind: input, shape index: {}]
  %s2 = inlined_call_operand.vmem [shape: f32[1,32], index: 2, kind: input, shape index: {}]
  %s3 = inlined_call_operand.vmem [shape: f32[8,32], index: 3, kind: input, shape index: {}]
  %s4 = inlined_call_operand.vmem [shape: bf16[2,32,96], index: 4, kind: input, shape index: {}]
  %s5 = inlined_call_operand.vmem [shape: f32[2,1,96], index: 5, kind: input, shape index: {}]
  %s6 = inlined_call_operand.vmem [shape: bf16[2,32,32], index: 6, kind: input, shape index: {}]
  %s7 = inlined_call_operand.vmem [shape: bf16[2,32,64], index: 7, kind: input, shape index: {}]
  %s8 = inlined_call_operand.vmem [shape: f32[2,1,64], index: 8, kind: input, shape index: {}]
  %s9 = inlined_call_operand.vmem [shape: bf16[2,64,32], index: 9, kind: input, shape index: {}]
  %s10 = inlined_call_operand.vmem [shape: f32[2,6,32], index: 10, kind: input, shape index: {}]
  %s11 = inlined_call_operand.hbm [shape: bf16[2,8,32], index: 11, kind: output, shape index: {}]
  %s12 = sld [smem:[#allocation0]]
  $region85: #{audio_encoder_forward.1} parent=0
    _
  %s14 = ssub.s32 1, %s12
  %s15 = scalar_select 0, %s14, %s12
  $region1: #{audio_encoder_forward.1} parent=0
    #allocation3 [shape = 'u8[4096]{0}', space=vmem, size = 0x1000, scoped, tag = 'output window, operand 0']
    #allocation4 [shape = 's32[2]{0}', space=sflag, size = 0x8, scoped, tag = 'scoped memory for audio_encoder_forward.1']
    %16 = vsyncpa [#allocation4], 0
    %s17 = scalar_lea.sflag [#allocation4], 1
    %18 = vsyncpa %s17, 0
    loop: start=0, step=1, limit=6
    $region2: #{audio_encoder_forward.1} parent=1 // loop_pre_header
      _
    $region3: #{audio_encoder_forward.1} parent=1 // loop_header
      %s20 = sphi 0, %s24
      %p21 = scmp.ge.s32.totalorder %s20, 6
      %s27 = sphi 0, %s39
      %s28 = sphi 0, %s35
      %s29 = sphi 0, %s27
      %s30 = sphi 0, %s28
      %s31 = sphi 0, %s29
      %s32 = sphi 0, %s30
      %s42 = sphi 0, %s44
      %s45 = sphi 0, %s42
      %s46 = sphi 0, %s45
      %s62 = sphi 0, %s46
      %s66 = sphi 0, %s66
      %s68 = sphi 0, %s66
      %s69 = sphi 0, %s68
      %s83 = sphi 0, %s69
      %s87 = sphi 0, %s87
      %s89 = sphi 0, %s87
      %s90 = sphi 0, %s89
      %s104 = sphi 0, %s90
      %s108 = sphi 0, %s108
      %s110 = sphi 0, %s108
      %s111 = sphi 0, %s110
      %s125 = sphi 0, %s111
      %s131 = sphi 0, %s133
      %s134 = sphi 0, %s131
      %s135 = sphi 0, %s134
      %s151 = sphi 0, %s135
      %s157 = sphi 0, %s159
      %s160 = sphi 0, %s157
      %s161 = sphi 0, %s160
      %s177 = sphi 0, %s161
      %s183 = sphi 0, %s185
      %s186 = sphi 0, %s183
      %s187 = sphi 0, %s186
      %s203 = sphi 0, %s187
      %s209 = sphi 0, %s211
      %s212 = sphi 0, %s209
      %s213 = sphi 0, %s212
      %s229 = sphi 0, %s213
      %s235 = sphi 0, %s237
      %s238 = sphi 0, %s235
      %s239 = sphi 0, %s238
      %s255 = sphi 0, %s239
      %s261 = sphi 0, %s263
      %s264 = sphi 0, %s261
      %s265 = sphi 0, %s264
      %s281 = sphi 0, %s265
      %s287 = sphi 0, %s289
      %s290 = sphi 0, %s287
      %s291 = sphi 0, %s290
      %s307 = sphi 0, %s291
      %s313 = sphi 0, %s315
      %s316 = sphi 0, %s313
      %s317 = sphi 0, %s316
      %s333 = sphi 0, %s317
    $region4: #{audio_encoder_forward.1} parent=1 // loop_header_branch
      %23 = sbr.rel (%p21) target = $region8
    $region5: #{audio_encoder_forward.1} parent=1 // loop_body
      %s25 = ssub.s32 %s20, 1
      %s26 = ssub.s32 %s20, 2
      %s33 = sadd.s32 1, %s28
      %p34 = scmp.ge.s32.totalorder %s33, 2
      %s35 = scalar_select %p34, 0, %s33
      %s36 = sadd.s32 1, %s27
      %s37 = scalar_select %p34, %s36, %s27
      %p38 = scmp.ge.s32.totalorder %s37, 2
      %s39 = scalar_select %p38, 0, %s37
      %s40 = ssub.s32 %s27, %s39
      %p41 = scmp.eq.s32.totalorder %s40, 0
      %s43 = sadd.s32 %s42, 1
      %s44 = scalar_select %p41, %s42, %s43
      %p47 = pneg %p41
      %p48 = scmp.eq.s32.totalorder %s20, 3
      %p49 = por %p47, %p48
      %p50 = scmp.ne.s32.totalorder %s42, %s45
      %p51 = scmp.eq.s32.totalorder %s20, 0
      %p52 = por %p50, %p51
      %p53 = scmp.ne.s32.totalorder %s42, %s45
      %p54 = scmp.eq.s32.totalorder %s25, 3
      %p55 = por %p53, %p54
      %p56 = scmp.ne.s32.totalorder %s45, %s46
      %p57 = scmp.eq.s32.totalorder %s25, 0
      %p58 = por %p56, %p57
      %p59 = scmp.ne.s32.totalorder %s45, %s46
      %p60 = scmp.eq.s32.totalorder %s26, 3
      %p61 = por %p59, %p60
      %p63 = scmp.ne.s32.totalorder %s46, %s62
      %p64 = scmp.eq.s32.totalorder %s26, 0
      %p65 = por %p63, %p64
      %s67 = sadd.s32 %s66, 1
      %p70 = scmp.eq.s32.totalorder %s20, 3
      %p71 = scmp.ne.s32.totalorder %s66, %s68
      %p72 = scmp.eq.s32.totalorder %s20, 0
      %p73 = por %p71, %p72
      %p74 = scmp.ne.s32.totalorder %s66, %s68
      %p75 = scmp.eq.s32.totalorder %s25, 3
      %p76 = por %p74, %p75
      %p77 = scmp.ne.s32.totalorder %s68, %s69
      %p78 = scmp.eq.s32.totalorder %s25, 0
      %p79 = por %p77, %p78
      %p80 = scmp.ne.s32.totalorder %s68, %s69
      %p81 = scmp.eq.s32.totalorder %s26, 3
      %p82 = por %p80, %p81
      %p84 = scmp.ne.s32.totalorder %s69, %s83
      %p85 = scmp.eq.s32.totalorder %s26, 0
      %p86 = por %p84, %p85
      %s88 = sadd.s32 %s87, 1
      %p91 = scmp.eq.s32.totalorder %s20, 3
      %p92 = scmp.ne.s32.totalorder %s87, %s89
      %p93 = scmp.eq.s32.totalorder %s20, 0
      %p94 = por %p92, %p93
      %p95 = scmp.ne.s32.totalorder %s87, %s89
      %p96 = scmp.eq.s32.totalorder %s25, 3
      %p97 = por %p95, %p96
      %p98 = scmp.ne.s32.totalorder %s89, %s90
      %p99 = scmp.eq.s32.totalorder %s25, 0
      %p100 = por %p98, %p99
      %p101 = scmp.ne.s32.totalorder %s89, %s90
      %p102 = scmp.eq.s32.totalorder %s26, 3
      %p103 = por %p101, %p102
      %p105 = scmp.ne.s32.totalorder %s90, %s104
      %p106 = scmp.eq.s32.totalorder %s26, 0
      %p107 = por %p105, %p106
      %s109 = sadd.s32 %s108, 1
      %p112 = scmp.eq.s32.totalorder %s20, 3
      %p113 = scmp.ne.s32.totalorder %s108, %s110
      %p114 = scmp.eq.s32.totalorder %s20, 0
      %p115 = por %p113, %p114
      %p116 = scmp.ne.s32.totalorder %s108, %s110
      %p117 = scmp.eq.s32.totalorder %s25, 3
      %p118 = por %p116, %p117
      %p119 = scmp.ne.s32.totalorder %s110, %s111
      %p120 = scmp.eq.s32.totalorder %s25, 0
      %p121 = por %p119, %p120
      %p122 = scmp.ne.s32.totalorder %s110, %s111
      %p123 = scmp.eq.s32.totalorder %s26, 3
      %p124 = por %p122, %p123
      %p126 = scmp.ne.s32.totalorder %s111, %s125
      %p127 = scmp.eq.s32.totalorder %s26, 0
      %p128 = por %p126, %p127
      %s129 = ssub.s32 %s28, %s35
      %p130 = scmp.eq.s32.totalorder %s129, 0
      %s132 = sadd.s32 %s131, 1
      %s133 = scalar_select %p130, %s131, %s132
      %p136 = pneg %p130
      %p137 = scmp.eq.s32.totalorder %s20, 3
      %p138 = por %p136, %p137
      %p139 = scmp.ne.s32.totalorder %s131, %s134
      %p140 = scmp.eq.s32.totalorder %s20, 0
      %p141 = por %p139, %p140
      %p142 = scmp.ne.s32.totalorder %s131, %s134
      %p143 = scmp.eq.s32.totalorder %s25, 3
      %p144 = por %p142, %p143
      %p145 = scmp.ne.s32.totalorder %s134, %s135
      %p146 = scmp.eq.s32.totalorder %s25, 0
      %p147 = por %p145, %p146
      %p148 = scmp.ne.s32.totalorder %s134, %s135
      %p149 = scmp.eq.s32.totalorder %s26, 3
      %p150 = por %p148, %p149
      %p152 = scmp.ne.s32.totalorder %s135, %s151
      %p153 = scmp.eq.s32.totalorder %s26, 0
      %p154 = por %p152, %p153
      %s155 = ssub.s32 %s28, %s35
      %p156 = scmp.eq.s32.totalorder %s155, 0
      %s158 = sadd.s32 %s157, 1
      %s159 = scalar_select %p156, %s157, %s158
      %p162 = pneg %p156
      %p163 = scmp.eq.s32.totalorder %s20, 3
      %p164 = por %p162, %p163
      %p165 = scmp.ne.s32.totalorder %s157, %s160
      %p166 = scmp.eq.s32.totalorder %s20, 0
      %p167 = por %p165, %p166
      %p168 = scmp.ne.s32.totalorder %s157, %s160
      %p169 = scmp.eq.s32.totalorder %s25, 3
      %p170 = por %p168, %p169
      %p171 = scmp.ne.s32.totalorder %s160, %s161
      %p172 = scmp.eq.s32.totalorder %s25, 0
      %p173 = por %p171, %p172
      %p174 = scmp.ne.s32.totalorder %s160, %s161
      %p175 = scmp.eq.s32.totalorder %s26, 3
      %p176 = por %p174, %p175
      %p178 = scmp.ne.s32.totalorder %s161, %s177
      %p179 = scmp.eq.s32.totalorder %s26, 0
      %p180 = por %p178, %p179
      %s181 = ssub.s32 %s28, %s35
      %p182 = scmp.eq.s32.totalorder %s181, 0
      %s184 = sadd.s32 %s183, 1
      %s185 = scalar_select %p182, %s183, %s184
      %p188 = pneg %p182
      %p189 = scmp.eq.s32.totalorder %s20, 3
      %p190 = por %p188, %p189
      %p191 = scmp.ne.s32.totalorder %s183, %s186
      %p192 = scmp.eq.s32.totalorder %s20, 0
      %p193 = por %p191, %p192
      %p194 = scmp.ne.s32.totalorder %s183, %s186
      %p195 = scmp.eq.s32.totalorder %s25, 3
      %p196 = por %p194, %p195
      %p197 = scmp.ne.s32.totalorder %s186, %s187
      %p198 = scmp.eq.s32.totalorder %s25, 0
      %p199 = por %p197, %p198
      %p200 = scmp.ne.s32.totalorder %s186, %s187
      %p201 = scmp.eq.s32.totalorder %s26, 3
      %p202 = por %p200, %p201
      %p204 = scmp.ne.s32.totalorder %s187, %s203
      %p205 = scmp.eq.s32.totalorder %s26, 0
      %p206 = por %p204, %p205
      %s207 = ssub.s32 %s28, %s35
      %p208 = scmp.eq.s32.totalorder %s207, 0
      %s210 = sadd.s32 %s209, 1
      %s211 = scalar_select %p208, %s209, %s210
      %p214 = pneg %p208
      %p215 = scmp.eq.s32.totalorder %s20, 3
      %p216 = por %p214, %p215
      %p217 = scmp.ne.s32.totalorder %s209, %s212
      %p218 = scmp.eq.s32.totalorder %s20, 0
      %p219 = por %p217, %p218
      %p220 = scmp.ne.s32.totalorder %s209, %s212
      %p221 = scmp.eq.s32.totalorder %s25, 3
      %p222 = por %p220, %p221
      %p223 = scmp.ne.s32.totalorder %s212, %s213
      %p224 = scmp.eq.s32.totalorder %s25, 0
      %p225 = por %p223, %p224
      %p226 = scmp.ne.s32.totalorder %s212, %s213
      %p227 = scmp.eq.s32.totalorder %s26, 3
      %p228 = por %p226, %p227
      %p230 = scmp.ne.s32.totalorder %s213, %s229
      %p231 = scmp.eq.s32.totalorder %s26, 0
      %p232 = por %p230, %p231
      %s233 = ssub.s32 %s28, %s35
      %p234 = scmp.eq.s32.totalorder %s233, 0
      %s236 = sadd.s32 %s235, 1
      %s237 = scalar_select %p234, %s235, %s236
      %p240 = pneg %p234
      %p241 = scmp.eq.s32.totalorder %s20, 3
      %p242 = por %p240, %p241
      %p243 = scmp.ne.s32.totalorder %s235, %s238
      %p244 = scmp.eq.s32.totalorder %s20, 0
      %p245 = por %p243, %p244
      %p246 = scmp.ne.s32.totalorder %s235, %s238
      %p247 = scmp.eq.s32.totalorder %s25, 3
      %p248 = por %p246, %p247
      %p249 = scmp.ne.s32.totalorder %s238, %s239
      %p250 = scmp.eq.s32.totalorder %s25, 0
      %p251 = por %p249, %p250
      %p252 = scmp.ne.s32.totalorder %s238, %s239
      %p253 = scmp.eq.s32.totalorder %s26, 3
      %p254 = por %p252, %p253
      %p256 = scmp.ne.s32.totalorder %s239, %s255
      %p257 = scmp.eq.s32.totalorder %s26, 0
      %p258 = por %p256, %p257
      %s259 = ssub.s32 %s28, %s35
      %p260 = scmp.eq.s32.totalorder %s259, 0
      %s262 = sadd.s32 %s261, 1
      %s263 = scalar_select %p260, %s261, %s262
      %p266 = pneg %p260
      %p267 = scmp.eq.s32.totalorder %s20, 3
      %p268 = por %p266, %p267
      %p269 = scmp.ne.s32.totalorder %s261, %s264
      %p270 = scmp.eq.s32.totalorder %s20, 0
      %p271 = por %p269, %p270
      %p272 = scmp.ne.s32.totalorder %s261, %s264
      %p273 = scmp.eq.s32.totalorder %s25, 3
      %p274 = por %p272, %p273
      %p275 = scmp.ne.s32.totalorder %s264, %s265
      %p276 = scmp.eq.s32.totalorder %s25, 0
      %p277 = por %p275, %p276
      %p278 = scmp.ne.s32.totalorder %s264, %s265
      %p279 = scmp.eq.s32.totalorder %s26, 3
      %p280 = por %p278, %p279
      %p282 = scmp.ne.s32.totalorder %s265, %s281
      %p283 = scmp.eq.s32.totalorder %s26, 0
      %p284 = por %p282, %p283
      %s285 = ssub.s32 %s28, %s35
      %p286 = scmp.eq.s32.totalorder %s285, 0
      %s288 = sadd.s32 %s287, 1
      %s289 = scalar_select %p286, %s287, %s288
      %p292 = pneg %p286
      %p293 = scmp.eq.s32.totalorder %s20, 3
      %p294 = por %p292, %p293
      %p295 = scmp.ne.s32.totalorder %s287, %s290
      %p296 = scmp.eq.s32.totalorder %s20, 0
      %p297 = por %p295, %p296
      %p298 = scmp.ne.s32.totalorder %s287, %s290
      %p299 = scmp.eq.s32.totalorder %s25, 3
      %p300 = por %p298, %p299
      %p301 = scmp.ne.s32.totalorder %s290, %s291
      %p302 = scmp.eq.s32.totalorder %s25, 0
      %p303 = por %p301, %p302
      %p304 = scmp.ne.s32.totalorder %s290, %s291
      %p305 = scmp.eq.s32.totalorder %s26, 3
      %p306 = por %p304, %p305
      %p308 = scmp.ne.s32.totalorder %s291, %s307
      %p309 = scmp.eq.s32.totalorder %s26, 0
      %p310 = por %p308, %p309
      %s311 = ssub.s32 %s27, %s39
      %p312 = scmp.eq.s32.totalorder %s311, 0
      %s314 = sadd.s32 %s313, 1
      %s315 = scalar_select %p312, %s313, %s314
      %p318 = pneg %p312
      %p319 = scmp.eq.s32.totalorder %s20, 3
      %p320 = por %p318, %p319
      %p321 = scmp.ne.s32.totalorder %s313, %s316
      %p322 = scmp.eq.s32.totalorder %s20, 0
      %p323 = por %p321, %p322
      %p324 = scmp.ne.s32.totalorder %s313, %s316
      %p325 = scmp.eq.s32.totalorder %s25, 3
      %p326 = por %p324, %p325
      %p327 = scmp.ne.s32.totalorder %s316, %s317
      %p328 = scmp.eq.s32.totalorder %s25, 0
      %p329 = por %p327, %p328
      %p330 = scmp.ne.s32.totalorder %s316, %s317
      %p331 = scmp.eq.s32.totalorder %s26, 3
      %p332 = por %p330, %p331
      %p334 = scmp.ne.s32.totalorder %s317, %s333
      %p335 = scmp.eq.s32.totalorder %s26, 0
      %p336 = por %p334, %p335
      %p337 = scmp.le.s32.totalorder 1, %s20
      %p338 = scmp.lt.s32.totalorder %s20, 5
      %p339 = pnand %p337, %p338
      %p340 = pneg %p339
      // Predicated region
      $region9: #{audio_encoder_forward.1} parent=5 // pred_check
        _
      $region10: #{audio_encoder_forward.1} parent=5 // pred_check_branch
        %342 = sbr.rel (%p339) target = $region12
      $region11: #{audio_encoder_forward.1} parent=5 // pred_region
        %s343 = ssub.s32 %s20, 1
        // Predicated region
        $region13: #{audio_encoder_forward.1} parent=11 // pred_check
          %p344 = pneg %p79
        $region14: #{audio_encoder_forward.1} parent=11 // pred_check_branch
          %346 = sbr.rel (%p344) target = $region16
        $region15: #{audio_encoder_forward.1} parent=11 // pred_region
          _
        $region16: #{audio_encoder_forward.1} parent=11 // pred_fallthru
          _
        // Predicated region
        $region17: #{audio_encoder_forward.1} parent=11 // pred_check
          %p347 = pneg %p100
        $region18: #{audio_encoder_forward.1} parent=11 // pred_check_branch
          %349 = sbr.rel (%p347) target = $region20
        $region19: #{audio_encoder_forward.1} parent=11 // pred_region
          _
        $region20: #{audio_encoder_forward.1} parent=11 // pred_fallthru
          _
        // Predicated region
        $region21: #{audio_encoder_forward.1} parent=11 // pred_check
          %p350 = pneg %p121
        $region22: #{audio_encoder_forward.1} parent=11 // pred_check_branch
          %352 = sbr.rel (%p350) target = $region24
        $region23: #{audio_encoder_forward.1} parent=11 // pred_region
          _
        $region24: #{audio_encoder_forward.1} parent=11 // pred_fallthru
          _
      $region12: #{audio_encoder_forward.1} parent=5 // pred_fallthru
        _
      %p353 = scmp.lt.s32.totalorder %s20, 4
      // Predicated region
      $region25: #{audio_encoder_forward.1} parent=5 // pred_check
        %p354 = pneg %p353
      $region26: #{audio_encoder_forward.1} parent=5 // pred_check_branch
        %356 = sbr.rel (%p354) target = $region28
      $region27: #{audio_encoder_forward.1} parent=5 // pred_region
        // Predicated region
        $region29: #{audio_encoder_forward.1} parent=27 // pred_check
          %p357 = pneg %p52
        $region30: #{audio_encoder_forward.1} parent=27 // pred_check_branch
          %359 = sbr.rel (%p357) target = $region32
        $region31: #{audio_encoder_forward.1} parent=27 // pred_region
          %p360 = scmp.lt.s32.totalorder %s27, 1
          %s361 = scalar_select %p360, %s27, 1
          %s362 = smul.addr %s361, 4
          %s363 = scalar_lea.vmem %s0, %s362
        $region32: #{audio_encoder_forward.1} parent=27 // pred_fallthru
          _
        // Predicated region
        $region33: #{audio_encoder_forward.1} parent=27 // pred_check
          %p364 = pneg %p141
        $region34: #{audio_encoder_forward.1} parent=27 // pred_check_branch
          %366 = sbr.rel (%p364) target = $region36
        $region35: #{audio_encoder_forward.1} parent=27 // pred_region
          %p367 = scmp.lt.s32.totalorder %s28, 1
          %s368 = scalar_select %p367, %s28, 1
          %s369 = smul.addr %s368, 4
          %s370 = smul.addr %s369, 4
          %s371 = scalar_lea.vmem %s4, %s370
        $region36: #{audio_encoder_forward.1} parent=27 // pred_fallthru
          _
        // Predicated region
        $region37: #{audio_encoder_forward.1} parent=27 // pred_check
          %p372 = pneg %p167
        $region38: #{audio_encoder_forward.1} parent=27 // pred_check_branch
          %374 = sbr.rel (%p372) target = $region40
        $region39: #{audio_encoder_forward.1} parent=27 // pred_region
          %p375 = scmp.lt.s32.totalorder %s28, 1
          %s376 = scalar_select %p375, %s28, 1
          %s377 = scalar_lea.vmem %s5, %s376
        $region40: #{audio_encoder_forward.1} parent=27 // pred_fallthru
          _
        // Predicated region
        $region41: #{audio_encoder_forward.1} parent=27 // pred_check
          %p378 = pneg %p193
        $region42: #{audio_encoder_forward.1} parent=27 // pred_check_branch
          %380 = sbr.rel (%p378) target = $region44
        $region43: #{audio_encoder_forward.1} parent=27 // pred_region
          %p381 = scmp.lt.s32.totalorder %s28, 1
          %s382 = scalar_select %p381, %s28, 1
          %s383 = smul.addr %s382, 4
          %s384 = smul.addr %s383, 4
          %s385 = scalar_lea.vmem %s6, %s384
        $region44: #{audio_encoder_forward.1} parent=27 // pred_fallthru
          _
        // Predicated region
        $region45: #{audio_encoder_forward.1} parent=27 // pred_check
          %p386 = pneg %p219
        $region46: #{audio_encoder_forward.1} parent=27 // pred_check_branch
          %388 = sbr.rel (%p386) target = $region48
        $region47: #{audio_encoder_forward.1} parent=27 // pred_region
          %p389 = scmp.lt.s32.totalorder %s28, 1
          %s390 = scalar_select %p389, %s28, 1
          %s391 = smul.addr %s390, 4
          %s392 = smul.addr %s391, 4
          %s393 = scalar_lea.vmem %s7, %s392
        $region48: #{audio_encoder_forward.1} parent=27 // pred_fallthru
          _
        // Predicated region
        $region49: #{audio_encoder_forward.1} parent=27 // pred_check
          %p394 = pneg %p245
        $region50: #{audio_encoder_forward.1} parent=27 // pred_check_branch
          %396 = sbr.rel (%p394) target = $region52
        $region51: #{audio_encoder_forward.1} parent=27 // pred_region
          %p397 = scmp.lt.s32.totalorder %s28, 1
          %s398 = scalar_select %p397, %s28, 1
          %s399 = scalar_lea.vmem %s8, %s398
        $region52: #{audio_encoder_forward.1} parent=27 // pred_fallthru
          _
        // Predicated region
        $region53: #{audio_encoder_forward.1} parent=27 // pred_check
          %p400 = pneg %p271
        $region54: #{audio_encoder_forward.1} parent=27 // pred_check_branch
          %402 = sbr.rel (%p400) target = $region56
        $region55: #{audio_encoder_forward.1} parent=27 // pred_region
          %p403 = scmp.lt.s32.totalorder %s28, 1
          %s404 = scalar_select %p403, %s28, 1
          %s405 = smul.addr %s404, 8
          %s406 = smul.addr %s405, 4
          %s407 = scalar_lea.vmem %s9, %s406
        $region56: #{audio_encoder_forward.1} parent=27 // pred_fallthru
          _
        // Predicated region
        $region57: #{audio_encoder_forward.1} parent=27 // pred_check
          %p408 = pneg %p297
        $region58: #{audio_encoder_forward.1} parent=27 // pred_check_branch
          %410 = sbr.rel (%p408) target = $region60
        $region59: #{audio_encoder_forward.1} parent=27 // pred_region
          %p411 = scmp.lt.s32.totalorder %s28, 1
          %s412 = scalar_select %p411, %s28, 1
          %s413 = smul.addr %s412, 8
          %s414 = scalar_lea.vmem %s10, %s413
        $region60: #{audio_encoder_forward.1} parent=27 // pred_fallthru
          _
      $region28: #{audio_encoder_forward.1} parent=5 // pred_fallthru
        _
      %p415 = scmp.le.s32.totalorder 1, %s20
      %p416 = scmp.lt.s32.totalorder %s20, 5
      %p417 = pnand %p415, %p416
      %p418 = pneg %p417
      // Predicated region
      $region61: #{audio_encoder_forward.1} parent=5 // pred_check
        _
      $region62: #{audio_encoder_forward.1} parent=5 // pred_check_branch
        %420 = sbr.rel (%p417) target = $region64
      $region63: #{audio_encoder_forward.1} parent=5 // pred_region
        %s421 = ssub.s32 %s20, 1
        %p422 = scmp.lt.s32.totalorder %s29, 1
        %s423 = scalar_select %p422, %s29, 1
        %s424 = smul.addr %s423, 4
        %s425 = scalar_lea.vmem %s0, %s424
        %p426 = pneg %p58
        %p427 = pneg %p55
        %p428 = pneg %p79
        %p429 = pneg %p76
        %p430 = pneg %p100
        %p431 = pneg %p97
        %p432 = pneg %p121
        %p433 = pneg %p118
        %p434 = scmp.lt.s32.totalorder %s30, 1
        %s435 = scalar_select %p434, %s30, 1
        %s436 = smul.addr %s435, 4
        %s437 = smul.addr %s436, 4
        %s438 = scalar_lea.vmem %s4, %s437
        %p439 = pneg %p147
        %p440 = pneg %p144
        %p441 = scmp.lt.s32.totalorder %s30, 1
        %s442 = scalar_select %p441, %s30, 1
        %s443 = scalar_lea.vmem %s5, %s442
        %p444 = pneg %p173
        %p445 = pneg %p170
        %p446 = scmp.lt.s32.totalorder %s30, 1
        %s447 = scalar_select %p446, %s30, 1
        %s448 = smul.addr %s447, 4
        %s449 = smul.addr %s448, 4
        %s450 = scalar_lea.vmem %s6, %s449
        %p451 = pneg %p199
        %p452 = pneg %p196
        %p453 = scmp.lt.s32.totalorder %s30, 1
        %s454 = scalar_select %p453, %s30, 1
        %s455 = smul.addr %s454, 4
        %s456 = smul.addr %s455, 4
        %s457 = scalar_lea.vmem %s7, %s456
        %p458 = pneg %p225
        %p459 = pneg %p222
        %p460 = scmp.lt.s32.totalorder %s30, 1
        %s461 = scalar_select %p460, %s30, 1
        %s462 = scalar_lea.vmem %s8, %s461
        %p463 = pneg %p251
        %p464 = pneg %p248
        %p465 = scmp.lt.s32.totalorder %s30, 1
        %s466 = scalar_select %p465, %s30, 1
        %s467 = smul.addr %s466, 8
        %s468 = smul.addr %s467, 4
        %s469 = scalar_lea.vmem %s9, %s468
        %p470 = pneg %p277
        %p471 = pneg %p274
        %p472 = scmp.lt.s32.totalorder %s30, 1
        %s473 = scalar_select %p472, %s30, 1
        %s474 = smul.addr %s473, 8
        %s475 = scalar_lea.vmem %s10, %s474
        %p476 = pneg %p303
        %p477 = pneg %p300
        %p478 = pneg %p329
        %p479 = pneg %p326
        %s480 = sand.u32 %s316, 1
        %s481 = scalar_lea.sflag [#allocation4], %s480
        %s482 = sand.u32 %s316, 1
        %s483 = smul.addr %s482, 4
        %s484 = scalar_lea.vmem [#allocation3], %s483
        %p485 = scmp.lt.s32.totalorder %s29, 1
        %s486 = scalar_select %p485, %s29, 1
        %s487 = smul.addr %s486, 4
        %s488 = scalar_lea.vmem %s0, %s487
        %p489 = scmp.lt.s32.totalorder %s30, 1
        %s490 = scalar_select %p489, %s30, 1
        %s491 = smul.addr %s490, 4
        %s492 = smul.addr %s491, 4
        %s493 = scalar_lea.vmem %s4, %s492
        %p494 = scmp.lt.s32.totalorder %s30, 1
        %s495 = scalar_select %p494, %s30, 1
        %s496 = scalar_lea.vmem %s5, %s495
        %p497 = scmp.lt.s32.totalorder %s30, 1
        %s498 = scalar_select %p497, %s30, 1
        %s499 = smul.addr %s498, 4
        %s500 = smul.addr %s499, 4
        %s501 = scalar_lea.vmem %s6, %s500
        %p502 = scmp.lt.s32.totalorder %s30, 1
        %s503 = scalar_select %p502, %s30, 1
        %s504 = smul.addr %s503, 4
        %s505 = smul.addr %s504, 4
        %s506 = scalar_lea.vmem %s7, %s505
        %p507 = scmp.lt.s32.totalorder %s30, 1
        %s508 = scalar_select %p507, %s30, 1
        %s509 = scalar_lea.vmem %s8, %s508
        %p510 = scmp.lt.s32.totalorder %s30, 1
        %s511 = scalar_select %p510, %s30, 1
        %s512 = smul.addr %s511, 8
        %s513 = smul.addr %s512, 4
        %s514 = scalar_lea.vmem %s9, %s513
        %p515 = scmp.lt.s32.totalorder %s30, 1
        %s516 = scalar_select %p515, %s30, 1
        %s517 = smul.addr %s516, 8
        %s518 = scalar_lea.vmem %s10, %s517
        %p520 = scmp.eq.s32.totalorder %s30, 0
        // Predicated region
        $region65: #{audio_encoder_forward.1} parent=63 // pred_check
          %p521 = pneg %p520
        $region66: #{audio_encoder_forward.1} parent=63 // pred_check_branch
          %523 = sbr.rel (%p521) target = $region68
        $region67: #{audio_encoder_forward.1} parent=63 // pred_region
          %v524 = vld [vmem:[%s488] sm:$0xf]
          %v525 = vld [vmem:[%s1] sm:$0xf]
          %v526 = vld [vmem:[%s1 + $0x4] sm:$0xf]
          %v527 = vld [vmem:[%s2] sm:$0x1]
          %v529 = vlaneseq
          %v530 = vshrl.u32 %v529, 7
          %v531 = vsub.s32 0, %v530
          %v532 = vrot.slane %v527, %v531
          %v536 = vunpack.c.l.b16 %v525
          %v537 = vunpack.c.l.b16 %v526
          %v538 = vpack.c.b16 %v537, %v536
          %vm540 = vcmask 130048
          %v542 = vsel %vm540, %v524, 0
          %544 = vmatprep.subr.bf16.mxu0 0
          %545 = vmatpush1.bf16.msra.mxu0 %v538
          %546 = vmatprep.subr.bf16.mxu0 0
          %547 = vmatpush1.bf16.msra.mxu0 0
          %548 = vmatprep.subr.bf16.mxu0 0
          %549 = vmatpush1.bf16.msra.mxu0 0
          %550 = vmatprep.subr.bf16.mxu0 0
          %551 = vmatpush1.bf16.msra.mxu0 0
          %552 = vmatprep.subr.bf16.mxu0 0
          %553 = vmatpush1.bf16.msra.mxu0 0
          %554 = vmatprep.subr.bf16.mxu0 0
          %555 = vmatpush1.bf16.msra.mxu0 0
          %556 = vmatprep.subr.bf16.mxu0 0
          %557 = vmatpush1.bf16.msra.mxu0 0
          %558 = vmatprep.subr.bf16.mxu0 0
          %559 = vmatpush1.bf16.msra.mxu0 0
          %560 = vmatprep.subr.bf16.mxu0 0
          %561 = vmatpush1.bf16.msra.mxu0 0
          %562 = vmatprep.subr.bf16.mxu0 0
          %563 = vmatpush1.bf16.msra.mxu0 0
          %564 = vmatprep.subr.bf16.mxu0 0
          %565 = vmatpush1.bf16.msra.mxu0 0
          %566 = vmatprep.subr.bf16.mxu0 0
          %567 = vmatpush1.bf16.msra.mxu0 0
          %568 = vmatprep.subr.bf16.mxu0 0
          %569 = vmatpush1.bf16.msra.mxu0 0
          %570 = vmatprep.subr.bf16.mxu0 0
          %571 = vmatpush1.bf16.msra.mxu0 0
          %572 = vmatprep.subr.bf16.mxu0 0
          %573 = vmatpush1.bf16.msra.mxu0 0
          %574 = vmatprep.subr.bf16.mxu0 0
          %575 = vmatpush1.bf16.msra.mxu0 0
          %576 = vmatprep.mubr.bf16.mxu0 0
          %577 = vmatmul.mubr.bf16.gmra.mrb[0].mxu0 %v542
          %v578 = vpop.f32.mrb[0].mxu0
          %v579 = vadd.f32 %v532, %v578
          %v580 = vpop.f32.mrb[0].mxu0
          %v581 = vpop.f32.mrb[0].mxu0
          %v582 = vpop.f32.mrb[0].mxu0
          %583 = vdwg.mxu0
          %v584 = vld [vmem:[%s3] sm:$0xff]
          %v585 = vadd.f32 %v579, %v584
          %vm586 = vcmask 261120
          %587 = vst.msk [vmem:[#allocation2] sm:$0xff] %vm586, %v585
        $region68: #{audio_encoder_forward.1} parent=63 // pred_fallthru
          _
        %v588 = vld [vmem:[#allocation2] sm:$0xff]
        %v589 = vpack.c.bf16 %v588, %v588
        %v590 = vld [vmem:[%s493] sm:$0xf]
        %v591 = vld [vmem:[%s493 + $0x4] sm:$0xf]
        %v592 = vld [vmem:[%s493 + $0x8] sm:$0xf]
        %v593 = vld [vmem:[%s493 + $0xc] sm:$0xf]
        %v594 = vld [vmem:[%s496] sm:$0x1]
        %v596 = vlaneseq
        %v597 = vshrl.u32 %v596, 7
        %v598 = vsub.s32 0, %v597
        %v599 = vrot.slane %v594, %v598
        %v605 = vunpack.c.l.b16 %v590
        %v606 = vunpack.c.l.b16 %v591
        %v607 = vunpack.c.l.b16 %v592
        %v608 = vunpack.c.l.b16 %v593
        %v609 = vpack.c.b16 %v606, %v605
        %v610 = vpack.c.b16 %v608, %v607
        %vm613 = vcmask 261120
        %v615 = vsel %vm613, %v589, 0
        %617 = vmatprep.subr.bf16.mxu0 0
        %618 = vmatpush1.bf16.msra.mxu0 %v609
        %619 = vmatprep.subr.bf16.mxu0 0
        %620 = vmatpush1.bf16.msra.mxu0 %v610
        %621 = vmatprep.subr.bf16.mxu0 0
        %622 = vmatpush1.bf16.msra.mxu0 0
        %623 = vmatprep.subr.bf16.mxu0 0
        %624 = vmatpush1.bf16.msra.mxu0 0
        %625 = vmatprep.subr.bf16.mxu0 0
        %626 = vmatpush1.bf16.msra.mxu0 0
        %627 = vmatprep.subr.bf16.mxu0 0
        %628 = vmatpush1.bf16.msra.mxu0 0
        %629 = vmatprep.subr.bf16.mxu0 0
        %630 = vmatpush1.bf16.msra.mxu0 0
        %631 = vmatprep.subr.bf16.mxu0 0
        %632 = vmatpush1.bf16.msra.mxu0 0
        %633 = vmatprep.subr.bf16.mxu0 0
        %634 = vmatpush1.bf16.msra.mxu0 0
        %635 = vmatprep.subr.bf16.mxu0 0
        %636 = vmatpush1.bf16.msra.mxu0 0
        %637 = vmatprep.subr.bf16.mxu0 0
        %638 = vmatpush1.bf16.msra.mxu0 0
        %639 = vmatprep.subr.bf16.mxu0 0
        %640 = vmatpush1.bf16.msra.mxu0 0
        %641 = vmatprep.subr.bf16.mxu0 0
        %642 = vmatpush1.bf16.msra.mxu0 0
        %643 = vmatprep.subr.bf16.mxu0 0
        %644 = vmatpush1.bf16.msra.mxu0 0
        %645 = vmatprep.subr.bf16.mxu0 0
        %646 = vmatpush1.bf16.msra.mxu0 0
        %647 = vmatprep.subr.bf16.mxu0 0
        %648 = vmatpush1.bf16.msra.mxu0 0
        %649 = vmatprep.mubr.bf16.mxu0 0
        %650 = vmatmul.mubr.bf16.gmra.mrb[0].mxu0 %v615
        %v651 = vpop.f32.mrb[0].mxu0
        %v652 = vadd.f32 %v599, %v651
        %v653 = vpop.f32.mrb[0].mxu0
        %v654 = vpop.f32.mrb[0].mxu0
        %v655 = vpop.f32.mrb[0].mxu0
        %656 = vdwg.mxu0
        %v657 = vpack.c.bf16 %v652, %v652
        %659 = vrot.lane.b32.xlu0 %v657, 96
        %v660 = vpop.permute.xlu0 %659
        %vm661 = vcmask 64512
        %v663 = vsel %vm661, %v657, 0
        %v666 = vsel %vm661, %v660, 0
        %668 = vmatprep.subr.bf16.mxu0 0
        %669 = vmatpush1.bf16.xpose.msra.mxu0 %v666
        %670 = vmatprep.subr.bf16.mxu0 0
        %671 = vmatpush1.bf16.xpose.msra.mxu0 0
        %672 = vmatprep.subr.bf16.mxu0 0
        %673 = vmatpush1.bf16.xpose.msra.mxu0 0
        %674 = vmatprep.subr.bf16.mxu0 0
        %675 = vmatpush1.bf16.xpose.msra.mxu0 0
        %676 = vmatprep.subr.bf16.mxu0 0
        %677 = vmatpush1.bf16.xpose.msra.mxu0 0
        %678 = vmatprep.subr.bf16.mxu0 0
        %679 = vmatpush1.bf16.xpose.msra.mxu0 0
        %680 = vmatprep.subr.bf16.mxu0 0
        %681 = vmatpush1.bf16.xpose.msra.mxu0 0
        %682 = vmatprep.subr.bf16.mxu0 0
        %683 = vmatpush1.bf16.xpose.msra.mxu0 0
        %684 = vmatprep.subr.bf16.mxu0 0
        %685 = vmatpush1.bf16.xpose.msra.mxu0 0
        %686 = vmatprep.subr.bf16.mxu0 0
        %687 = vmatpush1.bf16.xpose.msra.mxu0 0
        %688 = vmatprep.subr.bf16.mxu0 0
        %689 = vmatpush1.bf16.xpose.msra.mxu0 0
        %690 = vmatprep.subr.bf16.mxu0 0
        %691 = vmatpush1.bf16.xpose.msra.mxu0 0
        %692 = vmatprep.subr.bf16.mxu0 0
        %693 = vmatpush1.bf16.xpose.msra.mxu0 0
        %694 = vmatprep.subr.bf16.mxu0 0
        %695 = vmatpush1.bf16.xpose.msra.mxu0 0
        %696 = vmatprep.subr.bf16.mxu0 0
        %697 = vmatpush1.bf16.xpose.msra.mxu0 0
        %698 = vmatprep.subr.bf16.mxu0 0
        %699 = vmatpush1.bf16.xpose.msra.mxu0 0
        %700 = vmatprep.mubr.bf16.mxu0 0
        %701 = vmatmul.mubr.bf16.gmra.mrb[0].mxu0 %v663
        %v702 = vpop.f32.mrb[0].mxu0
        %v703 = vadd.f32 0.0, %v702
        %v704 = vpop.f32.mrb[0].mxu0
        %v705 = vpop.f32.mrb[0].mxu0
        %v706 = vpop.f32.mrb[0].mxu0
        %707 = vdwg.mxu0
        %v708 = vsel %vm661, %v703, -inf
        %709 = vmax.xlane.f32.xlu0 %v708
        %v710 = vpop.xlane.xlu0 %709
        %v711 = vsub.f32 %v703, %v710
        %v712 = vmul.f32 %v711, 1.442695
        %v713 = vpow.pop %v712
        %v714 = vsel %vm661, %v713, 0.0
        %715 = vadd.xlane.f32.xlu0 %v714
        %v716 = vpop.xlane.xlu0 %715
        %v717 = vrcp.pop %v716
        %v718 = vmul.f32 %v713, %v717
        %v719 = vpack.c.bf16 %v718, %v718
        %720 = vrot.lane.b32.xlu0 %v657, 64
        %v721 = vpop.permute.xlu0 %720
        %v723 = vsel %vm661, %v719, 0
        %vm725 = vcmask 1043456
        %v727 = vsel %vm725, %v721, 0
        %729 = vmatprep.subr.bf16.mxu0 0
        %730 = vmatpush1.bf16.msra.mxu0 %v727
        %731 = vmatprep.subr.bf16.mxu0 0
        %732 = vmatpush1.bf16.msra.mxu0 0
        %733 = vmatprep.subr.bf16.mxu0 0
        %734 = vmatpush1.bf16.msra.mxu0 0
        %735 = vmatprep.subr.bf16.mxu0 0
        %736 = vmatpush1.bf16.msra.mxu0 0
        %737 = vmatprep.subr.bf16.mxu0 0
        %738 = vmatpush1.bf16.msra.mxu0 0
        %739 = vmatprep.subr.bf16.mxu0 0
        %740 = vmatpush1.bf16.msra.mxu0 0
        %741 = vmatprep.subr.bf16.mxu0 0
        %742 = vmatpush1.bf16.msra.mxu0 0
        %743 = vmatprep.subr.bf16.mxu0 0
        %744 = vmatpush1.bf16.msra.mxu0 0
        %745 = vmatprep.subr.bf16.mxu0 0
        %746 = vmatpush1.bf16.msra.mxu0 0
        %747 = vmatprep.subr.bf16.mxu0 0
        %748 = vmatpush1.bf16.msra.mxu0 0
        %749 = vmatprep.subr.bf16.mxu0 0
        %750 = vmatpush1.bf16.msra.mxu0 0
        %751 = vmatprep.subr.bf16.mxu0 0
        %752 = vmatpush1.bf16.msra.mxu0 0
        %753 = vmatprep.subr.bf16.mxu0 0
        %754 = vmatpush1.bf16.msra.mxu0 0
        %755 = vmatprep.subr.bf16.mxu0 0
        %756 = vmatpush1.bf16.msra.mxu0 0
        %757 = vmatprep.subr.bf16.mxu0 0
        %758 = vmatpush1.bf16.msra.mxu0 0
        %759 = vmatprep.subr.bf16.mxu0 0
        %760 = vmatpush1.bf16.msra.mxu0 0
        %761 = vmatprep.mubr.bf16.mxu0 0
        %762 = vmatmul.mubr.bf16.gmra.mrb[0].mxu0 %v723
        %v763 = vpop.f32.mrb[0].mxu0
        %v764 = vadd.f32 0.0, %v763
        %v765 = vpop.f32.mrb[0].mxu0
        %v766 = vpop.f32.mrb[0].mxu0
        %v767 = vpop.f32.mrb[0].mxu0
        %768 = vdwg.mxu0
        %769 = vrot.lane.b32.xlu0 %v657, 120
        %v770 = vpop.permute.xlu0 %769
        %771 = vrot.lane.b32.xlu0 %v657, 88
        %v772 = vpop.permute.xlu0 %771
        %v774 = vsel %vm661, %v770, 0
        %v777 = vsel %vm661, %v772, 0
        %779 = vmatprep.subr.bf16.mxu0 0
        %780 = vmatpush1.bf16.xpose.msra.mxu0 %v777
        %781 = vmatprep.subr.bf16.mxu0 0
        %782 = vmatpush1.bf16.xpose.msra.mxu0 0
        %783 = vmatprep.subr.bf16.mxu0 0
        %784 = vmatpush1.bf16.xpose.msra.mxu0 0
        %785 = vmatprep.subr.bf16.mxu0 0
        %786 = vmatpush1.bf16.xpose.msra.mxu0 0
        %787 = vmatprep.subr.bf16.mxu0 0
        %788 = vmatpush1.bf16.xpose.msra.mxu0 0
        %789 = vmatprep.subr.bf16.mxu0 0
        %790 = vmatpush1.bf16.xpose.msra.mxu0 0
        %791 = vmatprep.subr.bf16.mxu0 0
        %792 = vmatpush1.bf16.xpose.msra.mxu0 0
        %793 = vmatprep.subr.bf16.mxu0 0
        %794 = vmatpush1.bf16.xpose.msra.mxu0 0
        %795 = vmatprep.subr.bf16.mxu0 0
        %796 = vmatpush1.bf16.xpose.msra.mxu0 0
        %797 = vmatprep.subr.bf16.mxu0 0
        %798 = vmatpush1.bf16.xpose.msra.mxu0 0
        %799 = vmatprep.subr.bf16.mxu0 0
        %800 = vmatpush1.bf16.xpose.msra.mxu0 0
        %801 = vmatprep.subr.bf16.mxu0 0
        %802 = vmatpush1.bf16.xpose.msra.mxu0 0
        %803 = vmatprep.subr.bf16.mxu0 0
        %804 = vmatpush1.bf16.xpose.msra.mxu0 0
        %805 = vmatprep.subr.bf16.mxu0 0
        %806 = vmatpush1.bf16.xpose.msra.mxu0 0
        %807 = vmatprep.subr.bf16.mxu0 0
        %808 = vmatpush1.bf16.xpose.msra.mxu0 0
        %809 = vmatprep.subr.bf16.mxu0 0
        %810 = vmatpush1.bf16.xpose.msra.mxu0 0
        %811 = vmatprep.mubr.bf16.mxu0 0
        %812 = vmatmul.mubr.bf16.gmra.mrb[0].mxu0 %v774
        %v813 = vpop.f32.mrb[0].mxu0
        %v814 = vadd.f32 0.0, %v813
        %v815 = vpop.f32.mrb[0].mxu0
        %v816 = vpop.f32.mrb[0].mxu0
        %v817 = vpop.f32.mrb[0].mxu0
        %818 = vdwg.mxu0
        %v819 = vsel %vm661, %v814, -inf
        %820 = vmax.xlane.f32.xlu0 %v819
        %v821 = vpop.xlane.xlu0 %820
        %v822 = vsub.f32 %v814, %v821
        %v823 = vmul.f32 %v822, 1.442695
        %v824 = vpow.pop %v823
        %v825 = vsel %vm661, %v824, 0.0
        %826 = vadd.xlane.f32.xlu0 %v825
        %v827 = vpop.xlane.xlu0 %826
        %v828 = vrcp.pop %v827
        %v829 = vmul.f32 %v824, %v828
        %v830 = vpack.c.bf16 %v829, %v829
        %831 = vrot.lane.b32.xlu0 %v657, 56
        %v832 = vpop.permute.xlu0 %831
        %v834 = vsel %vm661, %v830, 0
        %v837 = vsel %vm725, %v832, 0
        %839 = vmatprep.subr.bf16.mxu0 0
        %840 = vmatpush1.bf16.msra.mxu0 %v837
        %841 = vmatprep.subr.bf16.mxu0 0
        %842 = vmatpush1.bf16.msra.mxu0 0
        %843 = vmatprep.subr.bf16.mxu0 0
        %844 = vmatpush1.bf16.msra.mxu0 0
        %845 = vmatprep.subr.bf16.mxu0 0
        %846 = vmatpush1.bf16.msra.mxu0 0
        %847 = vmatprep.subr.bf16.mxu0 0
        %848 = vmatpush1.bf16.msra.mxu0 0
        %849 = vmatprep.subr.bf16.mxu0 0
        %850 = vmatpush1.bf16.msra.mxu0 0
        %851 = vmatprep.subr.bf16.mxu0 0
        %852 = vmatpush1.bf16.msra.mxu0 0
        %853 = vmatprep.subr.bf16.mxu0 0
        %854 = vmatpush1.bf16.msra.mxu0 0
        %855 = vmatprep.subr.bf16.mxu0 0
        %856 = vmatpush1.bf16.msra.mxu0 0
        %857 = vmatprep.subr.bf16.mxu0 0
        %858 = vmatpush1.bf16.msra.mxu0 0
        %859 = vmatprep.subr.bf16.mxu0 0
        %860 = vmatpush1.bf16.msra.mxu0 0
        %861 = vmatprep.subr.bf16.mxu0 0
        %862 = vmatpush1.bf16.msra.mxu0 0
        %863 = vmatprep.subr.bf16.mxu0 0
        %864 = vmatpush1.bf16.msra.mxu0 0
        %865 = vmatprep.subr.bf16.mxu0 0
        %866 = vmatpush1.bf16.msra.mxu0 0
        %867 = vmatprep.subr.bf16.mxu0 0
        %868 = vmatpush1.bf16.msra.mxu0 0
        %869 = vmatprep.subr.bf16.mxu0 0
        %870 = vmatpush1.bf16.msra.mxu0 0
        %871 = vmatprep.mubr.bf16.mxu0 0
        %872 = vmatmul.mubr.bf16.gmra.mrb[0].mxu0 %v834
        %v873 = vpop.f32.mrb[0].mxu0
        %v874 = vadd.f32 0.0, %v873
        %v875 = vpop.f32.mrb[0].mxu0
        %v876 = vpop.f32.mrb[0].mxu0
        %v877 = vpop.f32.mrb[0].mxu0
        %878 = vdwg.mxu0
        %879 = vrot.lane.b32.xlu0 %v657, 112
        %v880 = vpop.permute.xlu0 %879
        %881 = vrot.lane.b32.xlu0 %v657, 80
        %v882 = vpop.permute.xlu0 %881
        %v884 = vsel %vm661, %v880, 0
        %v887 = vsel %vm661, %v882, 0
        %889 = vmatprep.subr.bf16.mxu0 0
        %890 = vmatpush1.bf16.xpose.msra.mxu0 %v887
        %891 = vmatprep.subr.bf16.mxu0 0
        %892 = vmatpush1.bf16.xpose.msra.mxu0 0
        %893 = vmatprep.subr.bf16.mxu0 0
        %894 = vmatpush1.bf16.xpose.msra.mxu0 0
        %895 = vmatprep.subr.bf16.mxu0 0
        %896 = vmatpush1.bf16.xpose.msra.mxu0 0
        %897 = vmatprep.subr.bf16.mxu0 0
        %898 = vmatpush1.bf16.xpose.msra.mxu0 0
        %899 = vmatprep.subr.bf16.mxu0 0
        %900 = vmatpush1.bf16.xpose.msra.mxu0 0
        %901 = vmatprep.subr.bf16.mxu0 0
        %902 = vmatpush1.bf16.xpose.msra.mxu0 0
        %903 = vmatprep.subr.bf16.mxu0 0
        %904 = vmatpush1.bf16.xpose.msra.mxu0 0
        %905 = vmatprep.subr.bf16.mxu0 0
        %906 = vmatpush1.bf16.xpose.msra.mxu0 0
        %907 = vmatprep.subr.bf16.mxu0 0
        %908 = vmatpush1.bf16.xpose.msra.mxu0 0
        %909 = vmatprep.subr.bf16.mxu0 0
        %910 = vmatpush1.bf16.xpose.msra.mxu0 0
        %911 = vmatprep.subr.bf16.mxu0 0
        %912 = vmatpush1.bf16.xpose.msra.mxu0 0
        %913 = vmatprep.subr.bf16.mxu0 0
        %914 = vmatpush1.bf16.xpose.msra.mxu0 0
        %915 = vmatprep.subr.bf16.mxu0 0
        %916 = vmatpush1.bf16.xpose.msra.mxu0 0
        %917 = vmatprep.subr.bf16.mxu0 0
        %918 = vmatpush1.bf16.xpose.msra.mxu0 0
        %919 = vmatprep.subr.bf16.mxu0 0
        %920 = vmatpush1.bf16.xpose.msra.mxu0 0
        %921 = vmatprep.mubr.bf16.mxu0 0
        %922 = vmatmul.mubr.bf16.gmra.mrb[0].mxu0 %v884
        %v923 = vpop.f32.mrb[0].mxu0
        %v924 = vadd.f32 0.0, %v923
        %v925 = vpop.f32.mrb[0].mxu0
        %v926 = vpop.f32.mrb[0].mxu0
        %v927 = vpop.f32.mrb[0].mxu0
        %928 = vdwg.mxu0
        %v929 = vsel %vm661, %v924, -inf
        %930 = vmax.xlane.f32.xlu0 %v929
        %v931 = vpop.xlane.xlu0 %930
        %v932 = vsub.f32 %v924, %v931
        %v933 = vmul.f32 %v932, 1.442695
        %v934 = vpow.pop %v933
        %v935 = vsel %vm661, %v934, 0.0
        %936 = vadd.xlane.f32.xlu0 %v935
        %v937 = vpop.xlane.xlu0 %936
        %v938 = vrcp.pop %v937
        %v939 = vmul.f32 %v934, %v938
        %v940 = vpack.c.bf16 %v939, %v939
        %941 = vrot.lane.b32.xlu0 %v657, 48
        %v942 = vpop.permute.xlu0 %941
        %v944 = vsel %vm661, %v940, 0
        %v947 = vsel %vm725, %v942, 0
        %949 = vmatprep.subr.bf16.mxu0 0
        %950 = vmatpush1.bf16.msra.mxu0 %v947
        %951 = vmatprep.subr.bf16.mxu0 0
        %952 = vmatpush1.bf16.msra.mxu0 0
        %953 = vmatprep.subr.bf16.mxu0 0
        %954 = vmatpush1.bf16.msra.mxu0 0
        %955 = vmatprep.subr.bf16.mxu0 0
        %956 = vmatpush1.bf16.msra.mxu0 0
        %957 = vmatprep.subr.bf16.mxu0 0
        %958 = vmatpush1.bf16.msra.mxu0 0
        %959 = vmatprep.subr.bf16.mxu0 0
        %960 = vmatpush1.bf16.msra.mxu0 0
        %961 = vmatprep.subr.bf16.mxu0 0
        %962 = vmatpush1.bf16.msra.mxu0 0
        %963 = vmatprep.subr.bf16.mxu0 0
        %964 = vmatpush1.bf16.msra.mxu0 0
        %965 = vmatprep.subr.bf16.mxu0 0
        %966 = vmatpush1.bf16.msra.mxu0 0
        %967 = vmatprep.subr.bf16.mxu0 0
        %968 = vmatpush1.bf16.msra.mxu0 0
        %969 = vmatprep.subr.bf16.mxu0 0
        %970 = vmatpush1.bf16.msra.mxu0 0
        %971 = vmatprep.subr.bf16.mxu0 0
        %972 = vmatpush1.bf16.msra.mxu0 0
        %973 = vmatprep.subr.bf16.mxu0 0
        %974 = vmatpush1.bf16.msra.mxu0 0
        %975 = vmatprep.subr.bf16.mxu0 0
        %976 = vmatpush1.bf16.msra.mxu0 0
        %977 = vmatprep.subr.bf16.mxu0 0
        %978 = vmatpush1.bf16.msra.mxu0 0
        %979 = vmatprep.subr.bf16.mxu0 0
        %980 = vmatpush1.bf16.msra.mxu0 0
        %981 = vmatprep.mubr.bf16.mxu0 0
        %982 = vmatmul.mubr.bf16.gmra.mrb[0].mxu0 %v944
        %v983 = vpop.f32.mrb[0].mxu0
        %v984 = vadd.f32 0.0, %v983
        %v985 = vpop.f32.mrb[0].mxu0
        %v986 = vpop.f32.mrb[0].mxu0
        %v987 = vpop.f32.mrb[0].mxu0
        %988 = vdwg.mxu0
        %989 = vrot.lane.b32.xlu0 %v657, 104
        %v990 = vpop.permute.xlu0 %989
        %991 = vrot.lane.b32.xlu0 %v657, 72
        %v992 = vpop.permute.xlu0 %991
        %v994 = vsel %vm661, %v990, 0
        %v997 = vsel %vm661, %v992, 0
        %999 = vmatprep.subr.bf16.mxu0 0
        %1000 = vmatpush1.bf16.xpose.msra.mxu0 %v997
        %1001 = vmatprep.subr.bf16.mxu0 0
        %1002 = vmatpush1.bf16.xpose.msra.mxu0 0
        %1003 = vmatprep.subr.bf16.mxu0 0
        %1004 = vmatpush1.bf16.xpose.msra.mxu0 0
        %1005 = vmatprep.subr.bf16.mxu0 0
        %1006 = vmatpush1.bf16.xpose.msra.mxu0 0
        %1007 = vmatprep.subr.bf16.mxu0 0
        %1008 = vmatpush1.bf16.xpose.msra.mxu0 0
        %1009 = vmatprep.subr.bf16.mxu0 0
        %1010 = vmatpush1.bf16.xpose.msra.mxu0 0
        %1011 = vmatprep.subr.bf16.mxu0 0
        %1012 = vmatpush1.bf16.xpose.msra.mxu0 0
        %1013 = vmatprep.subr.bf16.mxu0 0
        %1014 = vmatpush1.bf16.xpose.msra.mxu0 0
        %1015 = vmatprep.subr.bf16.mxu0 0
        %1016 = vmatpush1.bf16.xpose.msra.mxu0 0
        %1017 = vmatprep.subr.bf16.mxu0 0
        %1018 = vmatpush1.bf16.xpose.msra.mxu0 0
        %1019 = vmatprep.subr.bf16.mxu0 0
        %1020 = vmatpush1.bf16.xpose.msra.mxu0 0
        %1021 = vmatprep.subr.bf16.mxu0 0
        %1022 = vmatpush1.bf16.xpose.msra.mxu0 0
        %1023 = vmatprep.subr.bf16.mxu0 0
        %1024 = vmatpush1.bf16.xpose.msra.mxu0 0
        %1025 = vmatprep.subr.bf16.mxu0 0
        %1026 = vmatpush1.bf16.xpose.msra.mxu0 0
        %1027 = vmatprep.subr.bf16.mxu0 0
        %1028 = vmatpush1.bf16.xpose.msra.mxu0 0
        %1029 = vmatprep.subr.bf16.mxu0 0
        %1030 = vmatpush1.bf16.xpose.msra.mxu0 0
        %1031 = vmatprep.mubr.bf16.mxu0 0
        %1032 = vmatmul.mubr.bf16.gmra.mrb[0].mxu0 %v994
        %v1033 = vpop.f32.mrb[0].mxu0
        %v1034 = vadd.f32 0.0, %v1033
        %v1035 = vpop.f32.mrb[0].mxu0
        %v1036 = vpop.f32.mrb[0].mxu0
        %v1037 = vpop.f32.mrb[0].mxu0
        %1038 = vdwg.mxu0
        %v1039 = vsel %vm661, %v1034, -inf
        %1040 = vmax.xlane.f32.xlu0 %v1039
        %v1041 = vpop.xlane.xlu0 %1040
        %v1042 = vsub.f32 %v1034, %v1041
        %v1043 = vmul.f32 %v1042, 1.442695
        %v1044 = vpow.pop %v1043
        %v1045 = vsel %vm661, %v1044, 0.0
        %1046 = vadd.xlane.f32.xlu0 %v1045
        %v1047 = vpop.xlane.xlu0 %1046
        %v1048 = vrcp.pop %v1047
        %v1049 = vmul.f32 %v1044, %v1048
        %v1050 = vpack.c.bf16 %v1049, %v1049
        %1051 = vrot.lane.b32.xlu0 %v657, 40
        %v1052 = vpop.permute.xlu0 %1051
        %v1054 = vsel %vm661, %v1050, 0
        %v1057 = vsel %vm725, %v1052, 0
        %1059 = vmatprep.subr.bf16.mxu0 0
        %1060 = vmatpush1.bf16.msra.mxu0 %v1057
        %1061 = vmatprep.subr.bf16.mxu0 0
        %1062 = vmatpush1.bf16.msra.mxu0 0
        %1063 = vmatprep.subr.bf16.mxu0 0
        %1064 = vmatpush1.bf16.msra.mxu0 0
        %1065 = vmatprep.subr.bf16.mxu0 0
        %1066 = vmatpush1.bf16.msra.mxu0 0
        %1067 = vmatprep.subr.bf16.mxu0 0
        %1068 = vmatpush1.bf16.msra.mxu0 0
        %1069 = vmatprep.subr.bf16.mxu0 0
        %1070 = vmatpush1.bf16.msra.mxu0 0
        %1071 = vmatprep.subr.bf16.mxu0 0
        %1072 = vmatpush1.bf16.msra.mxu0 0
        %1073 = vmatprep.subr.bf16.mxu0 0
        %1074 = vmatpush1.bf16.msra.mxu0 0
        %1075 = vmatprep.subr.bf16.mxu0 0
        %1076 = vmatpush1.bf16.msra.mxu0 0
        %1077 = vmatprep.subr.bf16.mxu0 0
        %1078 = vmatpush1.bf16.msra.mxu0 0
        %1079 = vmatprep.subr.bf16.mxu0 0
        %1080 = vmatpush1.bf16.msra.mxu0 0
        %1081 = vmatprep.subr.bf16.mxu0 0
        %1082 = vmatpush1.bf16.msra.mxu0 0
        %1083 = vmatprep.subr.bf16.mxu0 0
        %1084 = vmatpush1.bf16.msra.mxu0 0
        %1085 = vmatprep.subr.bf16.mxu0 0
        %1086 = vmatpush1.bf16.msra.mxu0 0
        %1087 = vmatprep.subr.bf16.mxu0 0
        %1088 = vmatpush1.bf16.msra.mxu0 0
        %1089 = vmatprep.subr.bf16.mxu0 0
        %1090 = vmatpush1.bf16.msra.mxu0 0
        %1091 = vmatprep.mubr.bf16.mxu0 0
        %1092 = vmatmul.mubr.bf16.gmra.mrb[0].mxu0 %v1054
        %v1093 = vpop.f32.mrb[0].mxu0
        %v1094 = vadd.f32 0.0, %v1093
        %v1095 = vpop.f32.mrb[0].mxu0
        %v1096 = vpop.f32.mrb[0].mxu0
        %v1097 = vpop.f32.mrb[0].mxu0
        %1098 = vdwg.mxu0
        %1100 = vrot.lane.b32.xlu0 %v874, 8
        %v1101 = vpop.permute.xlu0 %1100
        %1104 = vrot.lane.b32.xlu0 %v984, 16
        %v1105 = vpop.permute.xlu0 %1104
        %1108 = vrot.lane.b32.xlu0 %v1094, 24
        %v1109 = vpop.permute.xlu0 %1108
        %v1111 = vsel %vm661, %v764, %v1101
        %vm1112 = vcmask 130048
        %v1113 = vsel %vm1112, %v1111, %v1105
        %vm1114 = vcmask 195584
        %v1115 = vsel %vm1114, %v1113, %v1109
        %v1116 = vld [vmem:[%s518] sm:$0x3f]
        %v1117 = vpack.c.bf16 %v1115, %v1115
        %v1118 = vld [vmem:[%s501] sm:$0xf]
        %v1119 = vld [vmem:[%s501 + $0x4] sm:$0xf]
        %v1120 = vld [vmem:[%s501 + $0x8] sm:$0xf]
        %v1121 = vld [vmem:[%s501 + $0xc] sm:$0xf]
        %v1122 = vlaneseq
        %v1123 = vshrl.u32 %v1122, 7
        %v1124 = vsub.s32 0, %v1123
        %v1125 = vrot.slane %v1116, %v1124
        %v1130 = vunpack.c.l.b16 %v1118
        %v1131 = vunpack.c.l.b16 %v1119
        %v1132 = vunpack.c.l.b16 %v1120
        %v1133 = vunpack.c.l.b16 %v1121
        %v1134 = vpack.c.b16 %v1131, %v1130
        %v1135 = vpack.c.b16 %v1133, %v1132
        %v1139 = vsel %vm613, %v1117, 0
        %1141 = vmatprep.subr.bf16.mxu0 0
        %1142 = vmatpush1.bf16.msra.mxu0 %v1134
        %1143 = vmatprep.subr.bf16.mxu0 0
        %1144 = vmatpush1.bf16.msra.mxu0 %v1135
        %1145 = vmatprep.subr.bf16.mxu0 0
        %1146 = vmatpush1.bf16.msra.mxu0 0
        %1147 = vmatprep.subr.bf16.mxu0 0
        %1148 = vmatpush1.bf16.msra.mxu0 0
        %1149 = vmatprep.subr.bf16.mxu0 0
        %1150 = vmatpush1.bf16.msra.mxu0 0
        %1151 = vmatprep.subr.bf16.mxu0 0
        %1152 = vmatpush1.bf16.msra.mxu0 0
        %1153 = vmatprep.subr.bf16.mxu0 0
        %1154 = vmatpush1.bf16.msra.mxu0 0
        %1155 = vmatprep.subr.bf16.mxu0 0
        %1156 = vmatpush1.bf16.msra.mxu0 0
        %1157 = vmatprep.subr.bf16.mxu0 0
        %1158 = vmatpush1.bf16.msra.mxu0 0
        %1159 = vmatprep.subr.bf16.mxu0 0
        %1160 = vmatpush1.bf16.msra.mxu0 0
        %1161 = vmatprep.subr.bf16.mxu0 0
        %1162 = vmatpush1.bf16.msra.mxu0 0
        %1163 = vmatprep.subr.bf16.mxu0 0
        %1164 = vmatpush1.bf16.msra.mxu0 0
        %1165 = vmatprep.subr.bf16.mxu0 0
        %1166 = vmatpush1.bf16.msra.mxu0 0
        %1167 = vmatprep.subr.bf16.mxu0 0
        %1168 = vmatpush1.bf16.msra.mxu0 0
        %1169 = vmatprep.subr.bf16.mxu0 0
        %1170 = vmatpush1.bf16.msra.mxu0 0
        %1171 = vmatprep.subr.bf16.mxu0 0
        %1172 = vmatpush1.bf16.msra.mxu0 0
        %1173 = vmatprep.mubr.bf16.mxu0 0
        %1174 = vmatmul.mubr.bf16.gmra.mrb[0].mxu0 %v1139
        %v1175 = vpop.f32.mrb[0].mxu0
        %v1176 = vadd.f32 %v1125, %v1175
        %v1177 = vpop.f32.mrb[0].mxu0
        %v1178 = vpop.f32.mrb[0].mxu0
        %v1179 = vpop.f32.mrb[0].mxu0
        %1180 = vdwg.mxu0
        %v1181 = vadd.f32 %v1176, %v588
        %v1182 = vsel %vm613, %v1181, 0.0
        %1183 = vadd.xlane.f32.xlu0 %v1182
        %v1184 = vpop.xlane.xlu0 %1183
        %v1185 = vrcp.pop 32.0
        %v1186 = vmul.f32 %v1184, %v1185
        %v1187 = vsub.f32 %v1181, %v1186
        %v1188 = vmul.f32 %v1187, %v1187
        %v1189 = vsel %vm613, %v1188, 0.0
        %1190 = vadd.xlane.f32.xlu0 %v1189
        %v1191 = vpop.xlane.xlu0 %1190
        %v1192 = vmul.f32 %v1191, %v1185
        %v1193 = vadd.f32 %v1192, 1e-05
        %v1194 = vrsqrt.pop %v1193
        %v1195 = vmul.f32 %v1187, %v1194
        %v1196 = vlaneseq
        %v1197 = vshrl.u32 %v1196, 7
        %v1198 = vsub.s32 1, %v1197
        %v1199 = vrot.slane %v1116, %v1198
        %v1200 = vmul.f32 %v1195, %v1199
        %v1201 = vlaneseq
        %v1202 = vshrl.u32 %v1201, 7
        %v1203 = vsub.s32 2, %v1202
        %v1204 = vrot.slane %v1116, %v1203
        %v1205 = vadd.f32 %v1200, %v1204
        %v1206 = vpack.c.bf16 %v1205, %v1205
        %v1207 = vld [vmem:[%s506] sm:$0xf]
        %v1208 = vld [vmem:[%s506 + $0x4] sm:$0xf]
        %v1209 = vld [vmem:[%s506 + $0x8] sm:$0xf]
        %v1210 = vld [vmem:[%s506 + $0xc] sm:$0xf]
        %v1211 = vld [vmem:[%s509] sm:$0x1]
        %v1213 = vlaneseq
        %v1214 = vshrl.u32 %v1213, 7
        %v1215 = vsub.s32 0, %v1214
        %v1216 = vrot.slane %v1211, %v1215
        %v1222 = vunpack.c.l.b16 %v1207
        %v1223 = vunpack.c.l.b16 %v1208
        %v1224 = vunpack.c.l.b16 %v1209
        %v1225 = vunpack.c.l.b16 %v1210
        %v1226 = vpack.c.b16 %v1223, %v1222
        %v1227 = vpack.c.b16 %v1225, %v1224
        %v1231 = vsel %vm613, %v1206, 0
        %1233 = vmatprep.subr.bf16.mxu0 0
        %1234 = vmatpush1.bf16.msra.mxu0 %v1226
        %1235 = vmatprep.subr.bf16.mxu0 0
        %1236 = vmatpush1.bf16.msra.mxu0 %v1227
        %1237 = vmatprep.subr.bf16.mxu0 0
        %1238 = vmatpush1.bf16.msra.mxu0 0
        %1239 = vmatprep.subr.bf16.mxu0 0
        %1240 = vmatpush1.bf16.msra.mxu0 0
        %1241 = vmatprep.subr.bf16.mxu0 0
        %1242 = vmatpush1.bf16.msra.mxu0 0
        %1243 = vmatprep.subr.bf16.mxu0 0
        %1244 = vmatpush1.bf16.msra.mxu0 0
        %1245 = vmatprep.subr.bf16.mxu0 0
        %1246 = vmatpush1.bf16.msra.mxu0 0
        %1247 = vmatprep.subr.bf16.mxu0 0
        %1248 = vmatpush1.bf16.msra.mxu0 0
        %1249 = vmatprep.subr.bf16.mxu0 0
        %1250 = vmatpush1.bf16.msra.mxu0 0
        %1251 = vmatprep.subr.bf16.mxu0 0
        %1252 = vmatpush1.bf16.msra.mxu0 0
        %1253 = vmatprep.subr.bf16.mxu0 0
        %1254 = vmatpush1.bf16.msra.mxu0 0
        %1255 = vmatprep.subr.bf16.mxu0 0
        %1256 = vmatpush1.bf16.msra.mxu0 0
        %1257 = vmatprep.subr.bf16.mxu0 0
        %1258 = vmatpush1.bf16.msra.mxu0 0
        %1259 = vmatprep.subr.bf16.mxu0 0
        %1260 = vmatpush1.bf16.msra.mxu0 0
        %1261 = vmatprep.subr.bf16.mxu0 0
        %1262 = vmatpush1.bf16.msra.mxu0 0
        %1263 = vmatprep.subr.bf16.mxu0 0
        %1264 = vmatpush1.bf16.msra.mxu0 0
        %1265 = vmatprep.mubr.bf16.mxu0 0
        %1266 = vmatmul.mubr.bf16.gmra.mrb[0].mxu0 %v1231
        %v1267 = vpop.f32.mrb[0].mxu0
        %v1268 = vadd.f32 %v1216, %v1267
        %v1269 = vpop.f32.mrb[0].mxu0
        %v1270 = vpop.f32.mrb[0].mxu0
        %v1271 = vpop.f32.mrb[0].mxu0
        %1272 = vdwg.mxu0
        %v1273 = vmax.f32 %v1268, 0.0
        %v1274 = vpack.c.bf16 %v1273, %v1273
        %v1275 = vld [vmem:[%s514] sm:$0xf]
        %v1276 = vld [vmem:[%s514 + $0x4] sm:$0xf]
        %v1277 = vld [vmem:[%s514 + $0x8] sm:$0xf]
        %v1278 = vld [vmem:[%s514 + $0xc] sm:$0xf]
        %v1279 = vld [vmem:[%s514 + $0x10] sm:$0xf]
        %v1280 = vld [vmem:[%s514 + $0x14] sm:$0xf]
        %v1281 = vld [vmem:[%s514 + $0x18] sm:$0xf]
        %v1282 = vld [vmem:[%s514 + $0x1c] sm:$0xf]
        %v1283 = vlaneseq
        %v1284 = vshrl.u32 %v1283, 7
        %v1285 = vsub.s32 3, %v1284
        %v1286 = vrot.slane %v1116, %v1285
        %v1295 = vunpack.c.l.b16 %v1275
        %v1296 = vunpack.c.l.b16 %v1276
        %v1297 = vunpack.c.l.b16 %v1277
        %v1298 = vunpack.c.l.b16 %v1278
        %v1299 = vunpack.c.l.b16 %v1279
        %v1300 = vunpack.c.l.b16 %v1280
        %v1301 = vunpack.c.l.b16 %v1281
        %v1302 = vunpack.c.l.b16 %v1282
        %v1303 = vpack.c.b16 %v1296, %v1295
        %v1304 = vpack.c.b16 %v1298, %v1297
        %v1305 = vpack.c.b16 %v1300, %v1299
        %v1306 = vpack.c.b16 %v1302, %v1301
        %vm1311 = vcmask 523264
        %v1313 = vsel %vm1311, %v1274, 0
        %1315 = vmatprep.subr.bf16.mxu0 0
        %1316 = vmatpush1.bf16.msra.mxu0 %v1303
        %1317 = vmatprep.subr.bf16.mxu0 0
        %1318 = vmatpush1.bf16.msra.mxu0 %v1304
        %1319 = vmatprep.subr.bf16.mxu0 0
        %1320 = vmatpush1.bf16.msra.mxu0 %v1305
        %1321 = vmatprep.subr.bf16.mxu0 0
        %1322 = vmatpush1.bf16.msra.mxu0 %v1306
        %1323 = vmatprep.subr.bf16.mxu0 0
        %1324 = vmatpush1.bf16.msra.mxu0 0
        %1325 = vmatprep.subr.bf16.mxu0 0
        %1326 = vmatpush1.bf16.msra.mxu0 0
        %1327 = vmatprep.subr.bf16.mxu0 0
        %1328 = vmatpush1.bf16.msra.mxu0 0
        %1329 = vmatprep.subr.bf16.mxu0 0
        %1330 = vmatpush1.bf16.msra.mxu0 0
        %1331 = vmatprep.subr.bf16.mxu0 0
        %1332 = vmatpush1.bf16.msra.mxu0 0
        %1333 = vmatprep.subr.bf16.mxu0 0
        %1334 = vmatpush1.bf16.msra.mxu0 0
        %1335 = vmatprep.subr.bf16.mxu0 0
        %1336 = vmatpush1.bf16.msra.mxu0 0
        %1337 = vmatprep.subr.bf16.mxu0 0
        %1338 = vmatpush1.bf16.msra.mxu0 0
        %1339 = vmatprep.subr.bf16.mxu0 0
        %1340 = vmatpush1.bf16.msra.mxu0 0
        %1341 = vmatprep.subr.bf16.mxu0 0
        %1342 = vmatpush1.bf16.msra.mxu0 0
        %1343 = vmatprep.subr.bf16.mxu0 0
        %1344 = vmatpush1.bf16.msra.mxu0 0
        %1345 = vmatprep.subr.bf16.mxu0 0
        %1346 = vmatpush1.bf16.msra.mxu0 0
        %1347 = vmatprep.mubr.bf16.mxu0 0
        %1348 = vmatmul.mubr.bf16.gmra.mrb[0].mxu0 %v1313
        %v1349 = vpop.f32.mrb[0].mxu0
        %v1350 = vadd.f32 %v1286, %v1349
        %v1351 = vpop.f32.mrb[0].mxu0
        %v1352 = vpop.f32.mrb[0].mxu0
        %v1353 = vpop.f32.mrb[0].mxu0
        %1354 = vdwg.mxu0
        %v1355 = vadd.f32 %v1350, %v1205
        %v1356 = vsel %vm613, %v1355, 0.0
        %1357 = vadd.xlane.f32.xlu0 %v1356
        %v1358 = vpop.xlane.xlu0 %1357
        %v1359 = vmul.f32 %v1358, %v1185
        %v1360 = vsub.f32 %v1355, %v1359
        %v1361 = vmul.f32 %v1360, %v1360
        %v1362 = vsel %vm613, %v1361, 0.0
        %1363 = vadd.xlane.f32.xlu0 %v1362
        %v1364 = vpop.xlane.xlu0 %1363
        %v1365 = vmul.f32 %v1364, %v1185
        %v1366 = vadd.f32 %v1365, 1e-05
        %v1367 = vrsqrt.pop %v1366
        %v1368 = vmul.f32 %v1360, %v1367
        %v1369 = vlaneseq
        %v1370 = vshrl.u32 %v1369, 7
        %v1371 = vsub.s32 4, %v1370
        %v1372 = vrot.slane %v1116, %v1371
        %v1373 = vmul.f32 %v1368, %v1372
        %v1374 = vlaneseq
        %v1375 = vshrl.u32 %v1374, 7
        %v1376 = vsub.s32 5, %v1375
        %v1377 = vrot.slane %v1116, %v1376
        %v1378 = vadd.f32 %v1373, %v1377
        %1379 = vst.msk [vmem:[#allocation2] sm:$0xff] %vm613, %v1378
        %p1380 = scmp.eq.s32.totalorder %s30, 1
        // Predicated region
        $region69: #{audio_encoder_forward.1} parent=63 // pred_check
          %p1381 = pneg %p1380
        $region70: #{audio_encoder_forward.1} parent=63 // pred_check_branch
          %1383 = sbr.rel (%p1381) target = $region72
        $region71: #{audio_encoder_forward.1} parent=63 // pred_region
          %v1384 = vpack.c.bf16 %v1378, %v1378
          %vm1385 = vcmask 257024
          %1386 = vst.msk [vmem:[%s484] sm:$0xf] %vm1385, %v1384
        $region72: #{audio_encoder_forward.1} parent=63 // pred_fallthru
          _
        %s1387 = sand.u32 %s316, 1
        %s1388 = scalar_lea.sflag [#allocation4], %s1387
        %s1389 = sand.u32 %s316, 1
        %s1390 = smul.addr %s1389, 4
        %s1391 = scalar_lea.vmem [#allocation3], %s1390
        // Predicated region
        $region73: #{audio_encoder_forward.1} parent=63 // pred_check
          %p1392 = pneg %p326
        $region74: #{audio_encoder_forward.1} parent=63 // pred_check_branch
          %1394 = sbr.rel (%p1392) target = $region76
        $region75: #{audio_encoder_forward.1} parent=63 // pred_region
          %s1396 = ssub.s32 64, 64
          %1397 = vsyncadd %s1388, %s1396
          %s1398 = smul.addr %s29, 64
          %s1399 = scalar_lea.hbm %s11, %s1398
          %s1401 = sshll.u32 %s1391, 4
          %s1402 = int_to_ptr.vmem [resolvable:$true] %s1401
          %1404 = dma.vmem_to_hbm [thread:$0]  %s1402, 64, %s1399, %s1388
        $region76: #{audio_encoder_forward.1} parent=63 // pred_fallthru
          _
      $region64: #{audio_encoder_forward.1} parent=5 // pred_fallthru
        _
      %p1405 = scmp.le.s32.totalorder 2, %s20
      // Predicated region
      $region77: #{audio_encoder_forward.1} parent=5 // pred_check
        %p1406 = pneg %p1405
      $region78: #{audio_encoder_forward.1} parent=5 // pred_check_branch
        %1408 = sbr.rel (%p1406) target = $region80
      $region79: #{audio_encoder_forward.1} parent=5 // pred_region
        %s1409 = ssub.s32 %s20, 2
        // Predicated region
        $region81: #{audio_encoder_forward.1} parent=79 // pred_check
          %p1410 = pneg %p332
        $region82: #{audio_encoder_forward.1} parent=79 // pred_check_branch
          %1412 = sbr.rel (%p1410) target = $region84
        $region83: #{audio_encoder_forward.1} parent=79 // pred_region
          %s1413 = sand.u32 %s317, 1
          %s1414 = scalar_lea.sflag [#allocation4], %s1413
          %s1415 = sand.u32 %s317, 1
          %s1416 = smul.addr %s1415, 4
          %s1417 = scalar_lea.vmem [#allocation3], %s1416
          %1418 = dma.done %s1414, 64
        $region84: #{audio_encoder_forward.1} parent=79 // pred_fallthru
          _
      $region80: #{audio_encoder_forward.1} parent=5 // pred_fallthru
        _
    $region6: #{audio_encoder_forward.1} parent=1 // loop_footer
      %s24 = sadd.s32 1, %s20
    $region7: #{audio_encoder_forward.1} parent=1 // loop_footer_branch
      %19 = sbr.rel target = $region3
    $region8: #{audio_encoder_forward.1} parent=1 // loop_exit
      _
    %1419 = vsyncpa [#allocation4], 1
    %s1420 = scalar_lea.sflag [#allocation4], 1
    %1421 = vsyncpa %s1420, 1

</llo_original>
